<compile_context>
chip_gen: v7x
topology: tpu7x:2x2x1
jax: 0.10.0
libtpu: 0.0.40
codegen_flags: <defaults>
</compile_context>

<pallas_src>
import functools

import jax
import jax.numpy as jnp
from jax import lax
from jax.experimental import pallas as pl
from jax.experimental.pallas import tpu as pltpu

LN_EPS = 1e-5


def _layernorm(x, g, b):
    """Row LayerNorm in f32.  x:[N,E], g/b:[1,E]."""
    mu = jnp.mean(x, axis=-1, keepdims=True)
    var = jnp.mean(jnp.square(x - mu), axis=-1, keepdims=True)
    return (x - mu) * lax.rsqrt(var + LN_EPS) * g + b


# ---------------------------------------------------------------------------
# 1) Fused embedding kernel: h = x @ W_in + b_in + IdEmbed[ids]
# ---------------------------------------------------------------------------

def _embed_kernel(x_ref, ids_ref, w_in_ref, b_in_ref, table_ref, h_ref, *, num_ids):
    x = x_ref[0].astype(jnp.bfloat16)                              # [N, D]
    h = jnp.dot(x, w_in_ref[...], preferred_element_type=jnp.float32)
    h = h + b_in_ref[...]                                          # [N, E] f32
    # id-embedding gather fused as an exact one-hot matmul (tiny table -> MXU work).
    ids = ids_ref[0]                                               # [N, 1] int32
    iota = lax.broadcasted_iota(jnp.int32, (ids.shape[0], num_ids), 1)
    onehot = (ids == iota).astype(jnp.bfloat16)                    # [N, num_ids]
    h = h + jnp.dot(onehot, table_ref[...], preferred_element_type=jnp.float32)
    h_ref[0] = h


def embed(x, ids, w_in, b_in, table):
    B, N, D = x.shape
    E = w_in.shape[1]
    num_ids = table.shape[0]
    kern = functools.partial(_embed_kernel, num_ids=num_ids)
    return pl.pallas_call(
        kern,
        out_shape=jax.ShapeDtypeStruct((B, N, E), jnp.float32),
        grid=(B,),
        in_specs=[
            pl.BlockSpec((1, N, D), lambda b: (b, 0, 0)),
            pl.BlockSpec((1, N, 1), lambda b: (b, 0, 0)),
            pl.BlockSpec((D, E), lambda b: (0, 0)),
            pl.BlockSpec((1, E), lambda b: (0, 0)),
            pl.BlockSpec((num_ids, E), lambda b: (0, 0)),
        ],
        out_specs=pl.BlockSpec((1, N, E), lambda b: (b, 0, 0)),
        compiler_params=pltpu.CompilerParams(dimension_semantics=("parallel",)),
    )(x, ids.reshape(B, N, 1).astype(jnp.int32), w_in, b_in.reshape(1, E), table)


# ---------------------------------------------------------------------------
# 2) Fused transformer block kernel (per sequence):
#    h += skip_attn * Wo( MHA(LN1(h)) );  h += skip_fcn * MLP(LN2(h))
# ---------------------------------------------------------------------------

def _block_kernel(h_ref, ln1g_ref, ln1b_ref, wqkv_ref, bqkv_ref, wo_ref, bo_ref,
                  ln2g_ref, ln2b_ref, w1_ref, b1_ref, w2_ref, b2_ref, skips_ref,
                  o_ref, *, num_heads, embed_dim):
    dh = embed_dim // num_heads
    scale = 1.0 / (dh ** 0.5)
    bf = jnp.bfloat16

    h = h_ref[0]                                                   # [N, E] f32 residual stream

    # --- attention sub-block (pre-LN); attn_dropout = identity (eval) ---
    a = _layernorm(h, ln1g_ref[...], ln1b_ref[...])
    qkv = jnp.dot(a.astype(bf), wqkv_ref[...],
                  preferred_element_type=jnp.float32) + bqkv_ref[...]   # [N, 3E] f32

    head_outs = []
    for hd in range(num_heads):                                    # all heads in one grid step
        q = qkv[:, hd * dh:(hd + 1) * dh].astype(bf)
        k = qkv[:, embed_dim + hd * dh:embed_dim + (hd + 1) * dh].astype(bf)
        v = qkv[:, 2 * embed_dim + hd * dh:2 * embed_dim + (hd + 1) * dh].astype(bf)
        # contract last dims directly -> no materialized k.T / XLU transpose
        s = lax.dot_general(q, k, (((1,), (1,)), ((), ())),
                            preferred_element_type=jnp.float32) * scale   # [N, N]
        s = s - jnp.max(s, axis=-1, keepdims=True)
        p = jnp.exp(s)
        p = p * pl.reciprocal(jnp.sum(p, axis=-1, keepdims=True), approx=True)
        head_outs.append(jnp.dot(p.astype(bf), v,
                                 preferred_element_type=jnp.float32))     # [N, dh]
    attn = jnp.concatenate(head_outs, axis=-1)                     # [N, E]
    attn = jnp.dot(attn.astype(bf), wo_ref[...],
                   preferred_element_type=jnp.float32) + bo_ref[...]
    h = h + skips_ref[0] * attn                                    # residual in-kernel

    # --- feed-forward sub-block (pre-LN); fcn_dropout = identity (eval) ---
    m = _layernorm(h, ln2g_ref[...], ln2b_ref[...])
    hid = jnp.dot(m.astype(bf), w1_ref[...],
                  preferred_element_type=jnp.float32) + b1_ref[...]
    # TODO(synk): PyTorch nn.GELU default is exact erf; tanh approximation used in-kernel.
    hid = jax.nn.gelu(hid)
    f = jnp.dot(hid.astype(bf), w2_ref[...],
                preferred_element_type=jnp.float32) + b2_ref[...]
    h = h + skips_ref[1] * f

    o_ref[0] = h


def transformer_block(h, blk, *, num_heads):
    B, N, E = h.shape
    H = blk["w1"].shape[1]
    skips = jnp.stack([blk["skip_attn"], blk["skip_fcn"]])         # (2,) f32 -> SMEM

    def rep2(r, c):
        return pl.BlockSpec((r, c), lambda b: (0, 0))

    kern = functools.partial(_block_kernel, num_heads=num_heads, embed_dim=E)
    return pl.pallas_call(
        kern,
        out_shape=jax.ShapeDtypeStruct((B, N, E), jnp.float32),
        grid=(B,),
        in_specs=[
            pl.BlockSpec((1, N, E), lambda b: (b, 0, 0)),          # h (residual stream)
            rep2(1, E), rep2(1, E),                                # ln1 g, b
            rep2(E, 3 * E), rep2(1, 3 * E),                        # w_qkv, b_qkv
            rep2(E, E), rep2(1, E),                                # w_o, b_o
            rep2(1, E), rep2(1, E),                                # ln2 g, b
            rep2(E, H), rep2(1, H),                                # w1, b1
            rep2(H, E), rep2(1, E),                                # w2, b2
            pl.BlockSpec(memory_space=pltpu.MemorySpace.SMEM),     # skip scalars
        ],
        out_specs=pl.BlockSpec((1, N, E), lambda b: (b, 0, 0)),
        compiler_params=pltpu.CompilerParams(dimension_semantics=("parallel",)),
    )(h,
      blk["ln1_g"].reshape(1, E), blk["ln1_b"].reshape(1, E),
      blk["w_qkv"], blk["b_qkv"].reshape(1, 3 * E),
      blk["w_o"], blk["b_o"].reshape(1, E),
      blk["ln2_g"].reshape(1, E), blk["ln2_b"].reshape(1, E),
      blk["w1"], blk["b1"].reshape(1, H),
      blk["w2"], blk["b2"].reshape(1, E),
      skips)


# ---------------------------------------------------------------------------
# 3) Fused readout kernel: out = h @ W_out + b_out + skip_out * x
# ---------------------------------------------------------------------------

def _readout_kernel(h_ref, x_ref, w_out_ref, b_out_ref, skip_ref, o_ref):
    h = h_ref[0].astype(jnp.bfloat16)
    y = jnp.dot(h, w_out_ref[...], preferred_element_type=jnp.float32) + b_out_ref[...]
    o_ref[0] = (y + skip_ref[0] * x_ref[0]).astype(o_ref.dtype)


def readout(h, x, w_out, b_out, skip_out):
    B, N, E = h.shape
    D = w_out.shape[1]
    # NOTE: output is lane-sparse (data_dim=4 lanes); unavoidable given the module's
    # output shape -- at these sizes it is a single masked store per grid step.
    return pl.pallas_call(
        _readout_kernel,
        out_shape=jax.ShapeDtypeStruct((B, N, D), x.dtype),
        grid=(B,),
        in_specs=[
            pl.BlockSpec((1, N, E), lambda b: (b, 0, 0)),
            pl.BlockSpec((1, N, D), lambda b: (b, 0, 0)),
            pl.BlockSpec((E, D), lambda b: (0, 0)),
            pl.BlockSpec((1, D), lambda b: (0, 0)),
            pl.BlockSpec(memory_space=pltpu.MemorySpace.SMEM),
        ],
        out_specs=pl.BlockSpec((1, N, D), lambda b: (b, 0, 0)),
        compiler_params=pltpu.CompilerParams(dimension_semantics=("parallel",)),
    )(h, x, w_out, b_out.reshape(1, D), skip_out)


# ---------------------------------------------------------------------------
# Parameters (deterministic, synthetic).  MXU operand weights stored in bf16,
# biases / LN params / skip scalars in f32.
# ---------------------------------------------------------------------------

def init_params(key, *, data_dim, embed_dim, num_blocks, num_heads,
                fcn_dim_factor, num_ids, learnable_skip):
    del num_heads  # head count only affects the forward, not parameter shapes
    std = 0.02
    hidden = fcn_dim_factor * embed_dim
    wdt = jnp.bfloat16

    def nrm(k, shape):
        return (std * jax.random.normal(k, shape, dtype=jnp.float32)).astype(wdt)

    keys = jax.random.split(key, 4 + num_blocks)
    # learnable_skip=True -> trainable scalar skips; False -> fixed 1.0.  Same init value.
    skip0 = jnp.array(1.0, jnp.float32)
    params = {
        "w_in": nrm(keys[0], (data_dim, embed_dim)),
        "b_in": jnp.zeros((embed_dim,), jnp.float32),
        "id_embed": nrm(keys[1], (num_ids, embed_dim)),
        "w_out": nrm(keys[2], (embed_dim, data_dim)),
        "b_out": jnp.zeros((data_dim,), jnp.float32),
        "skip_out": jnp.ones((1,), jnp.float32) if learnable_skip else jnp.ones((1,), jnp.float32),
        "blocks": [],
    }
    for bi in range(num_blocks):
        bk = jax.random.split(keys[4 + bi], 4)
        params["blocks"].append({
            "ln1_g": jnp.ones((embed_dim,), jnp.float32),
            "ln1_b": jnp.zeros((embed_dim,), jnp.float32),
            "w_qkv": nrm(bk[0], (embed_dim, 3 * embed_dim)),
            "b_qkv": jnp.zeros((3 * embed_dim,), jnp.float32),
            "w_o": nrm(bk[1], (embed_dim, embed_dim)),
            "b_o": jnp.zeros((embed_dim,), jnp.float32),
            "ln2_g": jnp.ones((embed_dim,), jnp.float32),
            "ln2_b": jnp.zeros((embed_dim,), jnp.float32),
            "w1": nrm(bk[2], (embed_dim, hidden)),
            "b1": jnp.zeros((hidden,), jnp.float32),
            "w2": nrm(bk[3], (hidden, embed_dim)),
            "b2": jnp.zeros((embed_dim,), jnp.float32),
            "skip_attn": skip0,
            "skip_fcn": skip0,
        })
    return params


# ---------------------------------------------------------------------------
# Forward pass: 2 + num_blocks pallas_calls total
# ---------------------------------------------------------------------------

def simplex_transformer_forward(params, x, ids, *, num_heads):
    h = embed(x, ids, params["w_in"], params["b_in"], params["id_embed"])
    for blk in params["blocks"]:
        h = transformer_block(h, blk, num_heads=num_heads)
    return readout(h, x, params["w_out"], params["b_out"], params["skip_out"])


# ---------------------------------------------------------------------------
# Pure-JAX reference (same math / dtypes) for a self-consistency check
# ---------------------------------------------------------------------------

def reference_forward(params, x, ids, *, num_heads):
    f32, bf = jnp.float32, jnp.bfloat16
    B, N, D = x.shape
    E = params["w_in"].shape[1]
    dh = E // num_heads

    def ln(z, g, b):
        mu = jnp.mean(z, -1, keepdims=True)
        var = jnp.mean(jnp.square(z - mu), -1, keepdims=True)
        return (z - mu) * lax.rsqrt(var + LN_EPS) * g + b

    def mm(a, w):
        return jnp.dot(a.astype(bf), w, preferred_element_type=f32)

    tok = x.reshape(B * N, D).astype(f32)
    h = mm(tok, params["w_in"]) + params["b_in"]
    h = h + params["id_embed"][ids.reshape(-1)].astype(f32)
    for blk in params["blocks"]:
        a = ln(h, blk["ln1_g"], blk["ln1_b"])
        qkv = mm(a, blk["w_qkv"]) + blk["b_qkv"]
        q, k, v = jnp.split(qkv, 3, axis=-1)
        def heads(t):
            return t.reshape(B, N, num_heads, dh).transpose(0, 2, 1, 3)
        q, k, v = heads(q), heads(k), heads(v)
        s = jnp.einsum("bhqd,bhkd->bhqk", q, k) / jnp.sqrt(jnp.float32(dh))
        p = jax.nn.softmax(s, axis=-1)
        o = jnp.einsum("bhqk,bhkd->bhqd", p, v)
        o = o.transpose(0, 2, 1, 3).reshape(B * N, E)
        h = h + blk["skip_attn"] * (mm(o, blk["w_o"]) + blk["b_o"])
        m = ln(h, blk["ln2_g"], blk["ln2_b"])
        f = mm(jax.nn.gelu(mm(m, blk["w1"]) + blk["b1"]), blk["w2"]) + blk["b2"]
        h = h + blk["skip_fcn"] * f
    out = mm(h, params["w_out"]) + params["b_out"] + params["skip_out"][0] * tok
    return out.reshape(B, N, D)


# ---------------------------------------------------------------------------
# Main
# ---------------------------------------------------------------------------

if __name__ == "__main__":
    data_dim = 4
    embed_dim = 32
    num_blocks = 2
    num_heads = 4
    fcn_dim_factor = 4
    num_ids = 16
    learnable_skip = True
    B, N = 2, 8

    key = jax.random.PRNGKey(0)
    kp, kx, ki = jax.random.split(key, 3)

    params = init_params(
        kp, data_dim=data_dim, embed_dim=embed_dim, num_blocks=num_blocks,
        num_heads=num_heads, fcn_dim_factor=fcn_dim_factor, num_ids=num_ids,
        learnable_skip=learnable_skip)

    # Simplex-valued data: softmax over data_dim
    logits = jax.random.normal(kx, (B, N, data_dim), dtype=jnp.float32)
    x = jax.nn.softmax(logits, axis=-1)
    ids = jax.random.randint(ki, (B, N), 0, num_ids, dtype=jnp.int32)

    fwd = jax.jit(functools.partial(simplex_transformer_forward, num_heads=num_heads))
    out = fwd(params, x, ids)
    jax.block_until_ready(out)

    ref = reference_forward(params, x, ids, num_heads=num_heads)
    assert out.shape == (B, N, data_dim), out.shape
    assert bool(jnp.all(jnp.isfinite(out)))
    assert float(jnp.max(jnp.abs(out - ref))) < 5e-2, float(jnp.max(jnp.abs(out - ref)))
    print("KERNEL_OK")
</pallas_src>

<mosaic_0001>
module attributes {stable_mosaic.version = 11 : i64} {
  func.func @_embed_kernel(%arg0: i32, %arg1: memref<1x8x4xf32, #tpu.memory_space<vmem>>, %arg2: memref<1x8x1xi32, #tpu.memory_space<vmem>>, %arg3: memref<4x32xbf16, #tpu.memory_space<vmem>>, %arg4: memref<1x32xf32, #tpu.memory_space<vmem>>, %arg5: memref<16x32xbf16, #tpu.memory_space<vmem>>, %arg6: memref<1x8x32xf32, #tpu.memory_space<vmem>>) attributes {dimension_semantics = [#tpu.dimension_semantics<parallel>], iteration_bounds = array<i64: 2>, scalar_prefetch = 0 : i64, scratch_operands = 0 : i64, tpu.core_type = #tpu.core_type<tc>, window_params = [{transform_indices = @transform_0, window_bounds = array<i64: 1, 8, 4>}, {transform_indices = @transform_1, window_bounds = array<i64: 1, 8, 1>}, {pipeline_mode = #tpu.pipeline_mode<synchronous>, transform_indices = @transform_2, window_bounds = array<i64: 4, 32>}, {pipeline_mode = #tpu.pipeline_mode<synchronous>, transform_indices = @transform_3, window_bounds = array<i64: 1, 32>}, {pipeline_mode = #tpu.pipeline_mode<synchronous>, transform_indices = @transform_4, window_bounds = array<i64: 16, 32>}, {transform_indices = @transform_5, window_bounds = array<i64: 1, 8, 32>}]} {
    %c0 = arith.constant 0 : index
    %c0_0 = arith.constant 0 : index
    %c0_1 = arith.constant 0 : index
    %0 = vector.load %arg1[%c0, %c0_0, %c0_1] : memref<1x8x4xf32, #tpu.memory_space<vmem>>, vector<1x8x4xf32>
    %1 = vector.shape_cast %0 : vector<1x8x4xf32> to vector<8x4xf32>
    %2 = arith.truncf %1 : vector<8x4xf32> to vector<8x4xbf16>
    %c0_2 = arith.constant 0 : index
    %c0_3 = arith.constant 0 : index
    %3 = vector.load %arg3[%c0_2, %c0_3] : memref<4x32xbf16, #tpu.memory_space<vmem>>, vector<4x32xbf16>
    %cst = arith.constant dense<0.000000e+00> : vector<8x32xf32>
    %4 = tpu.matmul %2, %3, %cst {dimension_numbers = #tpu.dot_dimension_numbers<[1], [0], [0], [1], [0, 0, 1, 1], [], []>} : vector<8x4xbf16>, vector<4x32xbf16>, vector<8x32xf32> -> vector<8x32xf32>
    %c0_4 = arith.constant 0 : index
    %c0_5 = arith.constant 0 : index
    %5 = vector.load %arg4[%c0_4, %c0_5] : memref<1x32xf32, #tpu.memory_space<vmem>>, vector<1x32xf32>
    %6 = vector.broadcast %5 : vector<1x32xf32> to vector<8x32xf32>
    %7 = arith.addf %4, %6 : vector<8x32xf32>
    %c0_6 = arith.constant 0 : index
    %c0_7 = arith.constant 0 : index
    %c0_8 = arith.constant 0 : index
    %8 = vector.load %arg2[%c0_6, %c0_7, %c0_8] : memref<1x8x1xi32, #tpu.memory_space<vmem>>, vector<1x8x1xi32>
    %9 = vector.shape_cast %8 : vector<1x8x1xi32> to vector<8x1xi32>
    %10 = tpu.iota {dimensions = array<i32: 1>} : vector<8x16xi32>
    %11 = vector.broadcast %9 : vector<8x1xi32> to vector<8x16xi32>
    %12 = arith.cmpi eq, %11, %10 : vector<8x16xi32>
    %13 = arith.extui %12 : vector<8x16xi1> to vector<8x16xi32>
    %14 = arith.sitofp %13 : vector<8x16xi32> to vector<8x16xf32>
    %15 = arith.truncf %14 : vector<8x16xf32> to vector<8x16xbf16>
    %c0_9 = arith.constant 0 : index
    %c0_10 = arith.constant 0 : index
    %16 = vector.load %arg5[%c0_9, %c0_10] : memref<16x32xbf16, #tpu.memory_space<vmem>>, vector<16x32xbf16>
    %cst_11 = arith.constant dense<0.000000e+00> : vector<8x32xf32>
    %17 = tpu.matmul %15, %16, %cst_11 {dimension_numbers = #tpu.dot_dimension_numbers<[1], [0], [0], [1], [0, 0, 1, 1], [], []>} : vector<8x16xbf16>, vector<16x32xbf16>, vector<8x32xf32> -> vector<8x32xf32>
    %18 = arith.addf %7, %17 : vector<8x32xf32>
    %c0_12 = arith.constant 0 : index
    %c0_13 = arith.constant 0 : index
    %c0_14 = arith.constant 0 : index
    %19 = vector.load %arg6[%c0_12, %c0_13, %c0_14] : memref<1x8x32xf32, #tpu.memory_space<vmem>>, vector<1x8x32xf32>
    %20 = vector.shape_cast %19 : vector<1x8x32xf32> to vector<8x32xf32>
    %21 = vector.shape_cast %18 : vector<8x32xf32> to vector<1x8x32xf32>
    tpu.vector_store %arg6[%c0_12, %c0_13, %c0_14], %21 {strides = array<i32>} : memref<1x8x32xf32, #tpu.memory_space<vmem>>, vector<1x8x32xf32>,
    return
  }
  func.func @transform_0(%arg0: i32) -> (i32, i32, i32) {
    %c0_i32 = arith.constant 0 : i32
    %c0_i32_0 = arith.constant 0 : i32
    %c0_i32_1 = arith.constant 0 : i32
    return %arg0, %c0_i32, %c0_i32_0 : i32, i32, i32
  }
  func.func @transform_1(%arg0: i32) -> (i32, i32, i32) {
    %c0_i32 = arith.constant 0 : i32
    %c0_i32_0 = arith.constant 0 : i32
    %c0_i32_1 = arith.constant 0 : i32
    return %arg0, %c0_i32, %c0_i32_0 : i32, i32, i32
  }
  func.func @transform_2(%arg0: i32) -> (i32, i32) {
    %c0_i32 = arith.constant 0 : i32
    %c0_i32_0 = arith.constant 0 : i32
    %c0_i32_1 = arith.constant 0 : i32
    return %c0_i32, %c0_i32_0 : i32, i32
  }
  func.func @transform_3(%arg0: i32) -> (i32, i32) {
    %c0_i32 = arith.constant 0 : i32
    %c0_i32_0 = arith.constant 0 : i32
    %c0_i32_1 = arith.constant 0 : i32
    return %c0_i32, %c0_i32_0 : i32, i32
  }
  func.func @transform_4(%arg0: i32) -> (i32, i32) {
    %c0_i32 = arith.constant 0 : i32
    %c0_i32_0 = arith.constant 0 : i32
    %c0_i32_1 = arith.constant 0 : i32
    return %c0_i32, %c0_i32_0 : i32, i32
  }
  func.func @transform_5(%arg0: i32) -> (i32, i32, i32) {
    %c0_i32 = arith.constant 0 : i32
    %c0_i32_0 = arith.constant 0 : i32
    %c0_i32_1 = arith.constant 0 : i32
    return %arg0, %c0_i32, %c0_i32_0 : i32, i32, i32
  }
}

module attributes {stable_mosaic.version = 11 : i64} {
  func.func @_readout_kernel(%arg0: i32, %arg1: memref<1x8x32xf32, #tpu.memory_space<vmem>>, %arg2: memref<1x8x4xf32, #tpu.memory_space<vmem>>, %arg3: memref<32x4xbf16, #tpu.memory_space<vmem>>, %arg4: memref<1x4xf32, #tpu.memory_space<vmem>>, %arg5: memref<1xf32, #tpu.memory_space<smem>>, %arg6: memref<1x8x4xf32, #tpu.memory_space<vmem>>) attributes {dimension_semantics = [#tpu.dimension_semantics<parallel>], iteration_bounds = array<i64: 2>, scalar_prefetch = 0 : i64, scratch_operands = 0 : i64, tpu.core_type = #tpu.core_type<tc>, window_params = [{transform_indices = @transform_0, window_bounds = array<i64: 1, 8, 32>}, {transform_indices = @transform_1, window_bounds = array<i64: 1, 8, 4>}, {pipeline_mode = #tpu.pipeline_mode<synchronous>, transform_indices = @transform_2, window_bounds = array<i64: 32, 4>}, {pipeline_mode = #tpu.pipeline_mode<synchronous>, transform_indices = @transform_3, window_bounds = array<i64: 1, 4>}, {transform_indices = @transform_4, window_bounds = array<i64: 1>}, {transform_indices = @transform_5, window_bounds = array<i64: 1, 8, 4>}]} {
    %c0 = arith.constant 0 : index
    %c0_0 = arith.constant 0 : index
    %c0_1 = arith.constant 0 : index
    %0 = vector.load %arg1[%c0, %c0_0, %c0_1] : memref<1x8x32xf32, #tpu.memory_space<vmem>>, vector<1x8x32xf32>
    %1 = vector.shape_cast %0 : vector<1x8x32xf32> to vector<8x32xf32>
    %2 = arith.truncf %1 : vector<8x32xf32> to vector<8x32xbf16>
    %c0_2 = arith.constant 0 : index
    %c0_3 = arith.constant 0 : index
    %3 = vector.load %arg3[%c0_2, %c0_3] : memref<32x4xbf16, #tpu.memory_space<vmem>>, vector<32x4xbf16>
    %cst = arith.constant dense<0.000000e+00> : vector<8x4xf32>
    %4 = tpu.matmul %2, %3, %cst {dimension_numbers = #tpu.dot_dimension_numbers<[1], [0], [0], [1], [0, 0, 1, 1], [], []>} : vector<8x32xbf16>, vector<32x4xbf16>, vector<8x4xf32> -> vector<8x4xf32>
    %c0_4 = arith.constant 0 : index
    %c0_5 = arith.constant 0 : index
    %5 = vector.load %arg4[%c0_4, %c0_5] : memref<1x4xf32, #tpu.memory_space<vmem>>, vector<1x4xf32>
    %6 = vector.broadcast %5 : vector<1x4xf32> to vector<8x4xf32>
    %7 = arith.addf %4, %6 : vector<8x4xf32>
    %c0_6 = arith.constant 0 : index
    %8 = memref.load %arg5[%c0_6] : memref<1xf32, #tpu.memory_space<smem>>
    %c0_7 = arith.constant 0 : index
    %c0_8 = arith.constant 0 : index
    %c0_9 = arith.constant 0 : index
    %9 = vector.load %arg2[%c0_7, %c0_8, %c0_9] : memref<1x8x4xf32, #tpu.memory_space<vmem>>, vector<1x8x4xf32>
    %10 = vector.shape_cast %9 : vector<1x8x4xf32> to vector<8x4xf32>
    %11 = vector.broadcast %8 : f32 to vector<8x4xf32>
    %12 = arith.mulf %11, %10 : vector<8x4xf32>
    %13 = arith.addf %7, %12 : vector<8x4xf32>
    %c0_10 = arith.constant 0 : index
    %c0_11 = arith.constant 0 : index
    %c0_12 = arith.constant 0 : index
    %14 = vector.load %arg6[%c0_10, %c0_11, %c0_12] : memref<1x8x4xf32, #tpu.memory_space<vmem>>, vector<1x8x4xf32>
    %15 = vector.shape_cast %14 : vector<1x8x4xf32> to vector<8x4xf32>
    %16 = vector.shape_cast %13 : vector<8x4xf32> to vector<1x8x4xf32>
    tpu.vector_store %arg6[%c0_10, %c0_11, %c0_12], %16 {strides = array<i32>} : memref<1x8x4xf32, #tpu.memory_space<vmem>>, vector<1x8x4xf32>,
    return
  }
  func.func @transform_0(%arg0: i32) -> (i32, i32, i32) {
    %c0_i32 = arith.constant 0 : i32
    %c0_i32_0 = arith.constant 0 : i32
    %c0_i32_1 = arith.constant 0 : i32
    return %arg0, %c0_i32, %c0_i32_0 : i32, i32, i32
  }
  func.func @transform_1(%arg0: i32) -> (i32, i32, i32) {
    %c0_i32 = arith.constant 0 : i32
    %c0_i32_0 = arith.constant 0 : i32
    %c0_i32_1 = arith.constant 0 : i32
    return %arg0, %c0_i32, %c0_i32_0 : i32, i32, i32
  }
  func.func @transform_2(%arg0: i32) -> (i32, i32) {
    %c0_i32 = arith.constant 0 : i32
    %c0_i32_0 = arith.constant 0 : i32
    %c0_i32_1 = arith.constant 0 : i32
    return %c0_i32, %c0_i32_0 : i32, i32
  }
  func.func @transform_3(%arg0: i32) -> (i32, i32) {
    %c0_i32 = arith.constant 0 : i32
    %c0_i32_0 = arith.constant 0 : i32
    %c0_i32_1 = arith.constant 0 : i32
    return %c0_i32, %c0_i32_0 : i32, i32
  }
  func.func @transform_4(%arg0: i32) -> i32 {
    %c0_i32 = arith.constant 0 : i32
    %c0_i32_0 = arith.constant 0 : i32
    return %c0_i32 : i32
  }
  func.func @transform_5(%arg0: i32) -> (i32, i32, i32) {
    %c0_i32 = arith.constant 0 : i32
    %c0_i32_0 = arith.constant 0 : i32
    %c0_i32_1 = arith.constant 0 : i32
    return %arg0, %c0_i32, %c0_i32_0 : i32, i32, i32
  }
}

module attributes {stable_mosaic.version = 11 : i64} {
  func.func @_block_kernel(%arg0: i32, %arg1: memref<1x8x32xf32, #tpu.memory_space<vmem>>, %arg2: memref<1x32xf32, #tpu.memory_space<vmem>>, %arg3: memref<1x32xf32, #tpu.memory_space<vmem>>, %arg4: memref<32x96xbf16, #tpu.memory_space<vmem>>, %arg5: memref<1x96xf32, #tpu.memory_space<vmem>>, %arg6: memref<32x32xbf16, #tpu.memory_space<vmem>>, %arg7: memref<1x32xf32, #tpu.memory_space<vmem>>, %arg8: memref<1x32xf32, #tpu.memory_space<vmem>>, %arg9: memref<1x32xf32, #tpu.memory_space<vmem>>, %arg10: memref<32x128xbf16, #tpu.memory_space<vmem>>, %arg11: memref<1x128xf32, #tpu.memory_space<vmem>>, %arg12: memref<128x32xbf16, #tpu.memory_space<vmem>>, %arg13: memref<1x32xf32, #tpu.memory_space<vmem>>, %arg14: memref<2xf32, #tpu.memory_space<smem>>, %arg15: memref<1x8x32xf32, #tpu.memory_space<vmem>>) attributes {dimension_semantics = [#tpu.dimension_semantics<parallel>], iteration_bounds = array<i64: 2>, scalar_prefetch = 0 : i64, scratch_operands = 0 : i64, tpu.core_type = #tpu.core_type<tc>, window_params = [{transform_indices = @transform_0, window_bounds = array<i64: 1, 8, 32>}, {pipeline_mode = #tpu.pipeline_mode<synchronous>, transform_indices = @transform_1, window_bounds = array<i64: 1, 32>}, {pipeline_mode = #tpu.pipeline_mode<synchronous>, transform_indices = @transform_2, window_bounds = array<i64: 1, 32>}, {pipeline_mode = #tpu.pipeline_mode<synchronous>, transform_indices = @transform_3, window_bounds = array<i64: 32, 96>}, {pipeline_mode = #tpu.pipeline_mode<synchronous>, transform_indices = @transform_4, window_bounds = array<i64: 1, 96>}, {pipeline_mode = #tpu.pipeline_mode<synchronous>, transform_indices = @transform_5, window_bounds = array<i64: 32, 32>}, {pipeline_mode = #tpu.pipeline_mode<synchronous>, transform_indices = @transform_6, window_bounds = array<i64: 1, 32>}, {pipeline_mode = #tpu.pipeline_mode<synchronous>, transform_indices = @transform_7, window_bounds = array<i64: 1, 32>}, {pipeline_mode = #tpu.pipeline_mode<synchronous>, transform_indices = @transform_8, window_bounds = array<i64: 1, 32>}, {pipeline_mode = #tpu.pipeline_mode<synchronous>, transform_indices = @transform_9, window_bounds = array<i64: 32, 128>}, {pipeline_mode = #tpu.pipeline_mode<synchronous>, transform_indices = @transform_10, window_bounds = array<i64: 1, 128>}, {pipeline_mode = #tpu.pipeline_mode<synchronous>, transform_indices = @transform_11, window_bounds = array<i64: 128, 32>}, {pipeline_mode = #tpu.pipeline_mode<synchronous>, transform_indices = @transform_12, window_bounds = array<i64: 1, 32>}, {transform_indices = @transform_13, window_bounds = array<i64: 2>}, {transform_indices = @transform_14, window_bounds = array<i64: 1, 8, 32>}]} {
    %c0 = arith.constant 0 : index
    %c0_0 = arith.constant 0 : index
    %c0_1 = arith.constant 0 : index
    %0 = vector.load %arg1[%c0, %c0_0, %c0_1] : memref<1x8x32xf32, #tpu.memory_space<vmem>>, vector<1x8x32xf32>
    %1 = vector.shape_cast %0 : vector<1x8x32xf32> to vector<8x32xf32>
    %c0_2 = arith.constant 0 : index
    %c0_3 = arith.constant 0 : index
    %2 = vector.load %arg2[%c0_2, %c0_3] : memref<1x32xf32, #tpu.memory_space<vmem>>, vector<1x32xf32>
    %c0_4 = arith.constant 0 : index
    %c0_5 = arith.constant 0 : index
    %3 = vector.load %arg3[%c0_4, %c0_5] : memref<1x32xf32, #tpu.memory_space<vmem>>, vector<1x32xf32>
    %cst = arith.constant dense<0.000000e+00> : vector<8xf32>
    %4 = vector.multi_reduction <add>, %1, %cst [1] : vector<8x32xf32> to vector<8xf32>
    %5 = vector.shape_cast %4 : vector<8xf32> to vector<8x1xf32>
    %cst_6 = arith.constant 3.200000e+01 : f32
    %6 = vector.broadcast %cst_6 : f32 to vector<8x1xf32>
    %7 = arith.divf %5, %6 : vector<8x1xf32>
    %8 = vector.broadcast %7 : vector<8x1xf32> to vector<8x32xf32>
    %9 = arith.subf %1, %8 : vector<8x32xf32>
    %10 = arith.mulf %9, %9 : vector<8x32xf32>
    %cst_7 = arith.constant dense<0.000000e+00> : vector<8xf32>
    %11 = vector.multi_reduction <add>, %10, %cst_7 [1] : vector<8x32xf32> to vector<8xf32>
    %12 = vector.shape_cast %11 : vector<8xf32> to vector<8x1xf32>
    %cst_8 = arith.constant 3.200000e+01 : f32
    %13 = vector.broadcast %cst_8 : f32 to vector<8x1xf32>
    %14 = arith.divf %12, %13 : vector<8x1xf32>
    %15 = vector.broadcast %7 : vector<8x1xf32> to vector<8x32xf32>
    %16 = arith.subf %1, %15 : vector<8x32xf32>
    %cst_9 = arith.constant 9.99999974E-6 : f32
    %17 = vector.broadcast %cst_9 : f32 to vector<8x1xf32>
    %18 = arith.addf %14, %17 : vector<8x1xf32>
    %19 = math.rsqrt %18 : vector<8x1xf32>
    %20 = vector.broadcast %19 : vector<8x1xf32> to vector<8x32xf32>
    %21 = arith.mulf %16, %20 : vector<8x32xf32>
    %22 = vector.broadcast %2 : vector<1x32xf32> to vector<8x32xf32>
    %23 = arith.mulf %21, %22 : vector<8x32xf32>
    %24 = vector.broadcast %3 : vector<1x32xf32> to vector<8x32xf32>
    %25 = arith.addf %23, %24 : vector<8x32xf32>
    %26 = arith.truncf %25 : vector<8x32xf32> to vector<8x32xbf16>
    %c0_10 = arith.constant 0 : index
    %c0_11 = arith.constant 0 : index
    %27 = vector.load %arg4[%c0_10, %c0_11] : memref<32x96xbf16, #tpu.memory_space<vmem>>, vector<32x96xbf16>
    %cst_12 = arith.constant dense<0.000000e+00> : vector<8x96xf32>
    %28 = tpu.matmul %26, %27, %cst_12 {dimension_numbers = #tpu.dot_dimension_numbers<[1], [0], [0], [1], [0, 0, 1, 1], [], []>} : vector<8x32xbf16>, vector<32x96xbf16>, vector<8x96xf32> -> vector<8x96xf32>
    %c0_13 = arith.constant 0 : index
    %c0_14 = arith.constant 0 : index
    %29 = vector.load %arg5[%c0_13, %c0_14] : memref<1x96xf32, #tpu.memory_space<vmem>>, vector<1x96xf32>
    %30 = vector.broadcast %29 : vector<1x96xf32> to vector<8x96xf32>
    %31 = arith.addf %28, %30 : vector<8x96xf32>
    %32 = vector.extract_strided_slice %31 {offsets = [0, 0], sizes = [8, 8], strides = [1, 1]} : vector<8x96xf32> to vector<8x8xf32>
    %33 = arith.truncf %32 : vector<8x8xf32> to vector<8x8xbf16>
    %34 = vector.extract_strided_slice %31 {offsets = [0, 32], sizes = [8, 8], strides = [1, 1]} : vector<8x96xf32> to vector<8x8xf32>
    %35 = arith.truncf %34 : vector<8x8xf32> to vector<8x8xbf16>
    %36 = vector.extract_strided_slice %31 {offsets = [0, 64], sizes = [8, 8], strides = [1, 1]} : vector<8x96xf32> to vector<8x8xf32>
    %37 = arith.truncf %36 : vector<8x8xf32> to vector<8x8xbf16>
    %cst_15 = arith.constant dense<0.000000e+00> : vector<8x8xf32>
    %38 = tpu.matmul %33, %35, %cst_15 {dimension_numbers = #tpu.dot_dimension_numbers<[1], [1], [0], [0], [0, 0, 1, 0], [], []>} : vector<8x8xbf16>, vector<8x8xbf16>, vector<8x8xf32> -> vector<8x8xf32>
    %cst_16 = arith.constant 0.353553385 : f32
    %39 = vector.broadcast %cst_16 : f32 to vector<8x8xf32>
    %40 = arith.mulf %38, %39 : vector<8x8xf32>
    %cst_17 = arith.constant dense<0xFF800000> : vector<8xf32>
    %41 = vector.multi_reduction <maximumf>, %40, %cst_17 [1] : vector<8x8xf32> to vector<8xf32>
    %42 = vector.shape_cast %41 : vector<8xf32> to vector<8x1xf32>
    %43 = vector.broadcast %42 : vector<8x1xf32> to vector<8x8xf32>
    %44 = arith.subf %40, %43 : vector<8x8xf32>
    %45 = math.exp %44 : vector<8x8xf32>
    %cst_18 = arith.constant dense<0.000000e+00> : vector<8xf32>
    %46 = vector.multi_reduction <add>, %45, %cst_18 [1] : vector<8x8xf32> to vector<8xf32>
    %47 = vector.shape_cast %46 : vector<8xf32> to vector<8x1xf32>
    %48 = tpu.reciprocal %47 {approx = true} : vector<8x1xf32> -> vector<8x1xf32>
    %49 = vector.broadcast %48 : vector<8x1xf32> to vector<8x8xf32>
    %50 = arith.mulf %45, %49 : vector<8x8xf32>
    %51 = arith.truncf %50 : vector<8x8xf32> to vector<8x8xbf16>
    %cst_19 = arith.constant dense<0.000000e+00> : vector<8x8xf32>
    %52 = tpu.matmul %51, %37, %cst_19 {dimension_numbers = #tpu.dot_dimension_numbers<[1], [0], [0], [1], [0, 0, 1, 1], [], []>} : vector<8x8xbf16>, vector<8x8xbf16>, vector<8x8xf32> -> vector<8x8xf32>
    %53 = vector.extract_strided_slice %31 {offsets = [0, 8], sizes = [8, 8], strides = [1, 1]} : vector<8x96xf32> to vector<8x8xf32>
    %54 = arith.truncf %53 : vector<8x8xf32> to vector<8x8xbf16>
    %55 = vector.extract_strided_slice %31 {offsets = [0, 40], sizes = [8, 8], strides = [1, 1]} : vector<8x96xf32> to vector<8x8xf32>
    %56 = arith.truncf %55 : vector<8x8xf32> to vector<8x8xbf16>
    %57 = vector.extract_strided_slice %31 {offsets = [0, 72], sizes = [8, 8], strides = [1, 1]} : vector<8x96xf32> to vector<8x8xf32>
    %58 = arith.truncf %57 : vector<8x8xf32> to vector<8x8xbf16>
    %cst_20 = arith.constant dense<0.000000e+00> : vector<8x8xf32>
    %59 = tpu.matmul %54, %56, %cst_20 {dimension_numbers = #tpu.dot_dimension_numbers<[1], [1], [0], [0], [0, 0, 1, 0], [], []>} : vector<8x8xbf16>, vector<8x8xbf16>, vector<8x8xf32> -> vector<8x8xf32>
    %cst_21 = arith.constant 0.353553385 : f32
    %60 = vector.broadcast %cst_21 : f32 to vector<8x8xf32>
    %61 = arith.mulf %59, %60 : vector<8x8xf32>
    %cst_22 = arith.constant dense<0xFF800000> : vector<8xf32>
    %62 = vector.multi_reduction <maximumf>, %61, %cst_22 [1] : vector<8x8xf32> to vector<8xf32>
    %63 = vector.shape_cast %62 : vector<8xf32> to vector<8x1xf32>
    %64 = vector.broadcast %63 : vector<8x1xf32> to vector<8x8xf32>
    %65 = arith.subf %61, %64 : vector<8x8xf32>
    %66 = math.exp %65 : vector<8x8xf32>
    %cst_23 = arith.constant dense<0.000000e+00> : vector<8xf32>
    %67 = vector.multi_reduction <add>, %66, %cst_23 [1] : vector<8x8xf32> to vector<8xf32>
    %68 = vector.shape_cast %67 : vector<8xf32> to vector<8x1xf32>
    %69 = tpu.reciprocal %68 {approx = true} : vector<8x1xf32> -> vector<8x1xf32>
    %70 = vector.broadcast %69 : vector<8x1xf32> to vector<8x8xf32>
    %71 = arith.mulf %66, %70 : vector<8x8xf32>
    %72 = arith.truncf %71 : vector<8x8xf32> to vector<8x8xbf16>
    %cst_24 = arith.constant dense<0.000000e+00> : vector<8x8xf32>
    %73 = tpu.matmul %72, %58, %cst_24 {dimension_numbers = #tpu.dot_dimension_numbers<[1], [0], [0], [1], [0, 0, 1, 1], [], []>} : vector<8x8xbf16>, vector<8x8xbf16>, vector<8x8xf32> -> vector<8x8xf32>
    %74 = vector.extract_strided_slice %31 {offsets = [0, 16], sizes = [8, 8], strides = [1, 1]} : vector<8x96xf32> to vector<8x8xf32>
    %75 = arith.truncf %74 : vector<8x8xf32> to vector<8x8xbf16>
    %76 = vector.extract_strided_slice %31 {offsets = [0, 48], sizes = [8, 8], strides = [1, 1]} : vector<8x96xf32> to vector<8x8xf32>
    %77 = arith.truncf %76 : vector<8x8xf32> to vector<8x8xbf16>
    %78 = vector.extract_strided_slice %31 {offsets = [0, 80], sizes = [8, 8], strides = [1, 1]} : vector<8x96xf32> to vector<8x8xf32>
    %79 = arith.truncf %78 : vector<8x8xf32> to vector<8x8xbf16>
    %cst_25 = arith.constant dense<0.000000e+00> : vector<8x8xf32>
    %80 = tpu.matmul %75, %77, %cst_25 {dimension_numbers = #tpu.dot_dimension_numbers<[1], [1], [0], [0], [0, 0, 1, 0], [], []>} : vector<8x8xbf16>, vector<8x8xbf16>, vector<8x8xf32> -> vector<8x8xf32>
    %cst_26 = arith.constant 0.353553385 : f32
    %81 = vector.broadcast %cst_26 : f32 to vector<8x8xf32>
    %82 = arith.mulf %80, %81 : vector<8x8xf32>
    %cst_27 = arith.constant dense<0xFF800000> : vector<8xf32>
    %83 = vector.multi_reduction <maximumf>, %82, %cst_27 [1] : vector<8x8xf32> to vector<8xf32>
    %84 = vector.shape_cast %83 : vector<8xf32> to vector<8x1xf32>
    %85 = vector.broadcast %84 : vector<8x1xf32> to vector<8x8xf32>
    %86 = arith.subf %82, %85 : vector<8x8xf32>
    %87 = math.exp %86 : vector<8x8xf32>
    %cst_28 = arith.constant dense<0.000000e+00> : vector<8xf32>
    %88 = vector.multi_reduction <add>, %87, %cst_28 [1] : vector<8x8xf32> to vector<8xf32>
    %89 = vector.shape_cast %88 : vector<8xf32> to vector<8x1xf32>
    %90 = tpu.reciprocal %89 {approx = true} : vector<8x1xf32> -> vector<8x1xf32>
    %91 = vector.broadcast %90 : vector<8x1xf32> to vector<8x8xf32>
    %92 = arith.mulf %87, %91 : vector<8x8xf32>
    %93 = arith.truncf %92 : vector<8x8xf32> to vector<8x8xbf16>
    %cst_29 = arith.constant dense<0.000000e+00> : vector<8x8xf32>
    %94 = tpu.matmul %93, %79, %cst_29 {dimension_numbers = #tpu.dot_dimension_numbers<[1], [0], [0], [1], [0, 0, 1, 1], [], []>} : vector<8x8xbf16>, vector<8x8xbf16>, vector<8x8xf32> -> vector<8x8xf32>
    %95 = vector.extract_strided_slice %31 {offsets = [0, 24], sizes = [8, 8], strides = [1, 1]} : vector<8x96xf32> to vector<8x8xf32>
    %96 = arith.truncf %95 : vector<8x8xf32> to vector<8x8xbf16>
    %97 = vector.extract_strided_slice %31 {offsets = [0, 56], sizes = [8, 8], strides = [1, 1]} : vector<8x96xf32> to vector<8x8xf32>
    %98 = arith.truncf %97 : vector<8x8xf32> to vector<8x8xbf16>
    %99 = vector.extract_strided_slice %31 {offsets = [0, 88], sizes = [8, 8], strides = [1, 1]} : vector<8x96xf32> to vector<8x8xf32>
    %100 = arith.truncf %99 : vector<8x8xf32> to vector<8x8xbf16>
    %cst_30 = arith.constant dense<0.000000e+00> : vector<8x8xf32>
    %101 = tpu.matmul %96, %98, %cst_30 {dimension_numbers = #tpu.dot_dimension_numbers<[1], [1], [0], [0], [0, 0, 1, 0], [], []>} : vector<8x8xbf16>, vector<8x8xbf16>, vector<8x8xf32> -> vector<8x8xf32>
    %cst_31 = arith.constant 0.353553385 : f32
    %102 = vector.broadcast %cst_31 : f32 to vector<8x8xf32>
    %103 = arith.mulf %101, %102 : vector<8x8xf32>
    %cst_32 = arith.constant dense<0xFF800000> : vector<8xf32>
    %104 = vector.multi_reduction <maximumf>, %103, %cst_32 [1] : vector<8x8xf32> to vector<8xf32>
    %105 = vector.shape_cast %104 : vector<8xf32> to vector<8x1xf32>
    %106 = vector.broadcast %105 : vector<8x1xf32> to vector<8x8xf32>
    %107 = arith.subf %103, %106 : vector<8x8xf32>
    %108 = math.exp %107 : vector<8x8xf32>
    %cst_33 = arith.constant dense<0.000000e+00> : vector<8xf32>
    %109 = vector.multi_reduction <add>, %108, %cst_33 [1] : vector<8x8xf32> to vector<8xf32>
    %110 = vector.shape_cast %109 : vector<8xf32> to vector<8x1xf32>
    %111 = tpu.reciprocal %110 {approx = true} : vector<8x1xf32> -> vector<8x1xf32>
    %112 = vector.broadcast %111 : vector<8x1xf32> to vector<8x8xf32>
    %113 = arith.mulf %108, %112 : vector<8x8xf32>
    %114 = arith.truncf %113 : vector<8x8xf32> to vector<8x8xbf16>
    %cst_34 = arith.constant dense<0.000000e+00> : vector<8x8xf32>
    %115 = tpu.matmul %114, %100, %cst_34 {dimension_numbers = #tpu.dot_dimension_numbers<[1], [0], [0], [1], [0, 0, 1, 1], [], []>} : vector<8x8xbf16>, vector<8x8xbf16>, vector<8x8xf32> -> vector<8x8xf32>
    %116 = tpu.concatenate %52, %73, %94, %115 in 1 : vector<8x8xf32>, vector<8x8xf32>, vector<8x8xf32>, vector<8x8xf32> -> vector<8x32xf32>
    %117 = arith.truncf %116 : vector<8x32xf32> to vector<8x32xbf16>
    %c0_35 = arith.constant 0 : index
    %c0_36 = arith.constant 0 : index
    %118 = vector.load %arg6[%c0_35, %c0_36] : memref<32x32xbf16, #tpu.memory_space<vmem>>, vector<32x32xbf16>
    %cst_37 = arith.constant dense<0.000000e+00> : vector<8x32xf32>
    %119 = tpu.matmul %117, %118, %cst_37 {dimension_numbers = #tpu.dot_dimension_numbers<[1], [0], [0], [1], [0, 0, 1, 1], [], []>} : vector<8x32xbf16>, vector<32x32xbf16>, vector<8x32xf32> -> vector<8x32xf32>
    %c0_38 = arith.constant 0 : index
    %c0_39 = arith.constant 0 : index
    %120 = vector.load %arg7[%c0_38, %c0_39] : memref<1x32xf32, #tpu.memory_space<vmem>>, vector<1x32xf32>
    %121 = vector.broadcast %120 : vector<1x32xf32> to vector<8x32xf32>
    %122 = arith.addf %119, %121 : vector<8x32xf32>
    %c0_40 = arith.constant 0 : index
    %123 = memref.load %arg14[%c0_40] : memref<2xf32, #tpu.memory_space<smem>>
    %124 = vector.broadcast %123 : f32 to vector<8x32xf32>
    %125 = arith.mulf %124, %122 : vector<8x32xf32>
    %126 = arith.addf %1, %125 : vector<8x32xf32>
    %c0_41 = arith.constant 0 : index
    %c0_42 = arith.constant 0 : index
    %127 = vector.load %arg8[%c0_41, %c0_42] : memref<1x32xf32, #tpu.memory_space<vmem>>, vector<1x32xf32>
    %c0_43 = arith.constant 0 : index
    %c0_44 = arith.constant 0 : index
    %128 = vector.load %arg9[%c0_43, %c0_44] : memref<1x32xf32, #tpu.memory_space<vmem>>, vector<1x32xf32>
    %cst_45 = arith.constant dense<0.000000e+00> : vector<8xf32>
    %129 = vector.multi_reduction <add>, %126, %cst_45 [1] : vector<8x32xf32> to vector<8xf32>
    %130 = vector.shape_cast %129 : vector<8xf32> to vector<8x1xf32>
    %cst_46 = arith.constant 3.200000e+01 : f32
    %131 = vector.broadcast %cst_46 : f32 to vector<8x1xf32>
    %132 = arith.divf %130, %131 : vector<8x1xf32>
    %133 = vector.broadcast %132 : vector<8x1xf32> to vector<8x32xf32>
    %134 = arith.subf %126, %133 : vector<8x32xf32>
    %135 = arith.mulf %134, %134 : vector<8x32xf32>
    %cst_47 = arith.constant dense<0.000000e+00> : vector<8xf32>
    %136 = vector.multi_reduction <add>, %135, %cst_47 [1] : vector<8x32xf32> to vector<8xf32>
    %137 = vector.shape_cast %136 : vector<8xf32> to vector<8x1xf32>
    %cst_48 = arith.constant 3.200000e+01 : f32
    %138 = vector.broadcast %cst_48 : f32 to vector<8x1xf32>
    %139 = arith.divf %137, %138 : vector<8x1xf32>
    %140 = vector.broadcast %132 : vector<8x1xf32> to vector<8x32xf32>
    %141 = arith.subf %126, %140 : vector<8x32xf32>
    %cst_49 = arith.constant 9.99999974E-6 : f32
    %142 = vector.broadcast %cst_49 : f32 to vector<8x1xf32>
    %143 = arith.addf %139, %142 : vector<8x1xf32>
    %144 = math.rsqrt %143 : vector<8x1xf32>
    %145 = vector.broadcast %144 : vector<8x1xf32> to vector<8x32xf32>
    %146 = arith.mulf %141, %145 : vector<8x32xf32>
    %147 = vector.broadcast %127 : vector<1x32xf32> to vector<8x32xf32>
    %148 = arith.mulf %146, %147 : vector<8x32xf32>
    %149 = vector.broadcast %128 : vector<1x32xf32> to vector<8x32xf32>
    %150 = arith.addf %148, %149 : vector<8x32xf32>
    %151 = arith.truncf %150 : vector<8x32xf32> to vector<8x32xbf16>
    %c0_50 = arith.constant 0 : index
    %c0_51 = arith.constant 0 : index
    %152 = vector.load %arg10[%c0_50, %c0_51] : memref<32x128xbf16, #tpu.memory_space<vmem>>, vector<32x128xbf16>
    %cst_52 = arith.constant dense<0.000000e+00> : vector<8x128xf32>
    %153 = tpu.matmul %151, %152, %cst_52 {dimension_numbers = #tpu.dot_dimension_numbers<[1], [0], [0], [1], [0, 0, 1, 1], [], []>} : vector<8x32xbf16>, vector<32x128xbf16>, vector<8x128xf32> -> vector<8x128xf32>
    %c0_53 = arith.constant 0 : index
    %c0_54 = arith.constant 0 : index
    %154 = vector.load %arg11[%c0_53, %c0_54] : memref<1x128xf32, #tpu.memory_space<vmem>>, vector<1x128xf32>
    %155 = vector.broadcast %154 : vector<1x128xf32> to vector<8x128xf32>
    %156 = arith.addf %153, %155 : vector<8x128xf32>
    %157 = arith.mulf %156, %156 : vector<8x128xf32>
    %158 = arith.mulf %156, %157 : vector<8x128xf32>
    %cst_55 = arith.constant 4.471500e-02 : f32
    %159 = vector.broadcast %cst_55 : f32 to vector<8x128xf32>
    %160 = arith.mulf %159, %158 : vector<8x128xf32>
    %161 = arith.addf %156, %160 : vector<8x128xf32>
    %cst_56 = arith.constant 0.797884583 : f32
    %162 = vector.broadcast %cst_56 : f32 to vector<8x128xf32>
    %163 = arith.mulf %162, %161 : vector<8x128xf32>
    %164 = math.tanh %163 : vector<8x128xf32>
    %cst_57 = arith.constant 1.000000e+00 : f32
    %165 = vector.broadcast %cst_57 : f32 to vector<8x128xf32>
    %166 = arith.addf %165, %164 : vector<8x128xf32>
    %cst_58 = arith.constant 5.000000e-01 : f32
    %167 = vector.broadcast %cst_58 : f32 to vector<8x128xf32>
    %168 = arith.mulf %167, %166 : vector<8x128xf32>
    %169 = arith.mulf %156, %168 : vector<8x128xf32>
    %170 = arith.truncf %169 : vector<8x128xf32> to vector<8x128xbf16>
    %c0_59 = arith.constant 0 : index
    %c0_60 = arith.constant 0 : index
    %171 = vector.load %arg12[%c0_59, %c0_60] : memref<128x32xbf16, #tpu.memory_space<vmem>>, vector<128x32xbf16>
    %cst_61 = arith.constant dense<0.000000e+00> : vector<8x32xf32>
    %172 = tpu.matmul %170, %171, %cst_61 {dimension_numbers = #tpu.dot_dimension_numbers<[1], [0], [0], [1], [0, 0, 1, 1], [], []>} : vector<8x128xbf16>, vector<128x32xbf16>, vector<8x32xf32> -> vector<8x32xf32>
    %c0_62 = arith.constant 0 : index
    %c0_63 = arith.constant 0 : index
    %173 = vector.load %arg13[%c0_62, %c0_63] : memref<1x32xf32, #tpu.memory_space<vmem>>, vector<1x32xf32>
    %174 = vector.broadcast %173 : vector<1x32xf32> to vector<8x32xf32>
    %175 = arith.addf %172, %174 : vector<8x32xf32>
    %c1 = arith.constant 1 : index
    %176 = memref.load %arg14[%c1] : memref<2xf32, #tpu.memory_space<smem>>
    %177 = vector.broadcast %176 : f32 to vector<8x32xf32>
    %178 = arith.mulf %177, %175 : vector<8x32xf32>
    %179 = arith.addf %126, %178 : vector<8x32xf32>
    %c0_64 = arith.constant 0 : index
    %c0_65 = arith.constant 0 : index
    %c0_66 = arith.constant 0 : index
    %180 = vector.load %arg15[%c0_64, %c0_65, %c0_66] : memref<1x8x32xf32, #tpu.memory_space<vmem>>, vector<1x8x32xf32>
    %181 = vector.shape_cast %180 : vector<1x8x32xf32> to vector<8x32xf32>
    %182 = vector.shape_cast %179 : vector<8x32xf32> to vector<1x8x32xf32>
    tpu.vector_store %arg15[%c0_64, %c0_65, %c0_66], %182 {strides = array<i32>} : memref<1x8x32xf32, #tpu.memory_space<vmem>>, vector<1x8x32xf32>,
    return
  }
  func.func @transform_0(%arg0: i32) -> (i32, i32, i32) {
    %c0_i32 = arith.constant 0 : i32
    %c0_i32_0 = arith.constant 0 : i32
    %c0_i32_1 = arith.constant 0 : i32
    return %arg0, %c0_i32, %c0_i32_0 : i32, i32, i32
  }
  func.func @transform_1(%arg0: i32) -> (i32, i32) {
    %c0_i32 = arith.constant 0 : i32
    %c0_i32_0 = arith.constant 0 : i32
    %c0_i32_1 = arith.constant 0 : i32
    return %c0_i32, %c0_i32_0 : i32, i32
  }
  func.func @transform_2(%arg0: i32) -> (i32, i32) {
    %c0_i32 = arith.constant 0 : i32
    %c0_i32_0 = arith.constant 0 : i32
    %c0_i32_1 = arith.constant 0 : i32
    return %c0_i32, %c0_i32_0 : i32, i32
  }
  func.func @transform_3(%arg0: i32) -> (i32, i32) {
    %c0_i32 = arith.constant 0 : i32
    %c0_i32_0 = arith.constant 0 : i32
    %c0_i32_1 = arith.constant 0 : i32
    return %c0_i32, %c0_i32_0 : i32, i32
  }
  func.func @transform_4(%arg0: i32) -> (i32, i32) {
    %c0_i32 = arith.constant 0 : i32
    %c0_i32_0 = arith.constant 0 : i32
    %c0_i32_1 = arith.constant 0 : i32
    return %c0_i32, %c0_i32_0 : i32, i32
  }
  func.func @transform_5(%arg0: i32) -> (i32, i32) {
    %c0_i32 = arith.constant 0 : i32
    %c0_i32_0 = arith.constant 0 : i32
    %c0_i32_1 = arith.constant 0 : i32
    return %c0_i32, %c0_i32_0 : i32, i32
  }
  func.func @transform_6(%arg0: i32) -> (i32, i32) {
    %c0_i32 = arith.constant 0 : i32
    %c0_i32_0 = arith.constant 0 : i32
    %c0_i32_1 = arith.constant 0 : i32
    return %c0_i32, %c0_i32_0 : i32, i32
  }
  func.func @transform_7(%arg0: i32) -> (i32, i32) {
    %c0_i32 = arith.constant 0 : i32
    %c0_i32_0 = arith.constant 0 : i32
    %c0_i32_1 = arith.constant 0 : i32
    return %c0_i32, %c0_i32_0 : i32, i32
  }
  func.func @transform_8(%arg0: i32) -> (i32, i32) {
    %c0_i32 = arith.constant 0 : i32
    %c0_i32_0 = arith.constant 0 : i32
    %c0_i32_1 = arith.constant 0 : i32
    return %c0_i32, %c0_i32_0 : i32, i32
  }
  func.func @transform_9(%arg0: i32) -> (i32, i32) {
    %c0_i32 = arith.constant 0 : i32
    %c0_i32_0 = arith.constant 0 : i32
    %c0_i32_1 = arith.constant 0 : i32
    return %c0_i32, %c0_i32_0 : i32, i32
  }
  func.func @transform_10(%arg0: i32) -> (i32, i32) {
    %c0_i32 = arith.constant 0 : i32
    %c0_i32_0 = arith.constant 0 : i32
    %c0_i32_1 = arith.constant 0 : i32
    return %c0_i32, %c0_i32_0 : i32, i32
  }
  func.func @transform_11(%arg0: i32) -> (i32, i32) {
    %c0_i32 = arith.constant 0 : i32
    %c0_i32_0 = arith.constant 0 : i32
    %c0_i32_1 = arith.constant 0 : i32
    return %c0_i32, %c0_i32_0 : i32, i32
  }
  func.func @transform_12(%arg0: i32) -> (i32, i32) {
    %c0_i32 = arith.constant 0 : i32
    %c0_i32_0 = arith.constant 0 : i32
    %c0_i32_1 = arith.constant 0 : i32
    return %c0_i32, %c0_i32_0 : i32, i32
  }
  func.func @transform_13(%arg0: i32) -> i32 {
    %c0_i32 = arith.constant 0 : i32
    %c0_i32_0 = arith.constant 0 : i32
    return %c0_i32 : i32
  }
  func.func @transform_14(%arg0: i32) -> (i32, i32, i32) {
    %c0_i32 = arith.constant 0 : i32
    %c0_i32_0 = arith.constant 0 : i32
    %c0_i32_1 = arith.constant 0 : i32
    return %arg0, %c0_i32, %c0_i32_0 : i32, i32, i32
  }
}

</mosaic_0001>

<llo_original>
// kernel: simplex_transformer_forward.7
$region0: #{simplex_transformer_forward.7}
  #allocation0 [shape = 'u32[]', space=smem, size = 0x4, offset = 0x4, fixed_abs, tag = 'smem constant byte address 0x4 - core index']
  #allocation1 [shape = 'u32[144,128]{1,0:T(1,128)}', space=vmem, size = 0x12000, scoped, tag = 'internal scratch']
  #allocation2 [shape = 'f32[1]{0:T(128)S(6)}', space=smem, size = 0x200, scoped, tag = 'scoped memory for simplex_transformer_forward.7']
  %s0 = inlined_call_operand.vmem [shape: f32[2,8,32], index: 0, kind: input, shape index: {}]
  %s1 = inlined_call_operand.vmem [shape: f32[2,8,4], index: 1, kind: input, shape index: {}]
  %s2 = inlined_call_operand.vmem [shape: bf16[32,4], index: 2, kind: input, shape index: {}]
  %s3 = inlined_call_operand.vmem [shape: f32[1,4], index: 3, kind: input, shape index: {}]
  %s4 = inlined_call_operand.<no memory space> [shape: f32[1], index: 4, kind: input, shape index: {}]
  %s5 = inlined_call_operand.vmem [shape: f32[2,8,4], index: 5, kind: output, shape index: {}]
  %s6 = sld [smem:[#allocation0]]
  $region53: #{simplex_transformer_forward.7} parent=0
    _
  %s8 = ssub.s32 1, %s6
  %s9 = scalar_select 0, %s8, %s6
  %10 = sst [smem:[#allocation2]] %s4
  loop: start=0, step=1, limit=4
  $region2: #{simplex_transformer_forward.7} parent=0 // loop_pre_header
    _
  $region3: #{simplex_transformer_forward.7} parent=0 // loop_header
    %s12 = sphi 0, %s16
    %p13 = scmp.ge.s32.totalorder %s12, 4
    %s22 = sphi 0, %s24
    %s25 = sphi 0, %s22
    %s26 = sphi 0, %s25
    %s42 = sphi 0, %s26
    %s48 = sphi 0, %s50
    %s51 = sphi 0, %s48
    %s52 = sphi 0, %s51
    %s68 = sphi 0, %s52
    %s72 = sphi 0, %s72
    %s74 = sphi 0, %s72
    %s75 = sphi 0, %s74
    %s89 = sphi 0, %s75
    %s93 = sphi 0, %s93
    %s95 = sphi 0, %s93
    %s96 = sphi 0, %s95
    %s110 = sphi 0, %s96
    %s114 = sphi 0, %s114
    %s116 = sphi 0, %s114
    %s117 = sphi 0, %s116
    %s131 = sphi 0, %s117
    %s137 = sphi 0, %s139
    %s140 = sphi 0, %s137
    %s141 = sphi 0, %s140
    %s157 = sphi 0, %s141
  $region4: #{simplex_transformer_forward.7} parent=0 // loop_header_branch
    %15 = sbr.rel (%p13) target = $region8
  $region5: #{simplex_transformer_forward.7} parent=0 // loop_body
    %s17 = ssub.s32 %s12, 1
    %s18 = ssub.s32 %s12, 2
    %s19 = sadd.s32 %s12, 1
    %s20 = ssub.s32 %s12, %s19
    %p21 = scmp.eq.s32.totalorder %s20, 0
    %s23 = sadd.s32 %s22, 1
    %s24 = scalar_select %p21, %s22, %s23
    %p27 = pneg %p21
    %p28 = scmp.eq.s32.totalorder %s12, 1
    %p29 = por %p27, %p28
    %p30 = scmp.ne.s32.totalorder %s22, %s25
    %p31 = scmp.eq.s32.totalorder %s12, 0
    %p32 = por %p30, %p31
    %p33 = scmp.ne.s32.totalorder %s22, %s25
    %p34 = scmp.eq.s32.totalorder %s17, 1
    %p35 = por %p33, %p34
    %p36 = scmp.ne.s32.totalorder %s25, %s26
    %p37 = scmp.eq.s32.totalorder %s17, 0
    %p38 = por %p36, %p37
    %p39 = scmp.ne.s32.totalorder %s25, %s26
    %p40 = scmp.eq.s32.totalorder %s18, 1
    %p41 = por %p39, %p40
    %p43 = scmp.ne.s32.totalorder %s26, %s42
    %p44 = scmp.eq.s32.totalorder %s18, 0
    %p45 = por %p43, %p44
    %s46 = ssub.s32 %s12, %s19
    %p47 = scmp.eq.s32.totalorder %s46, 0
    %s49 = sadd.s32 %s48, 1
    %s50 = scalar_select %p47, %s48, %s49
    %p53 = pneg %p47
    %p54 = scmp.eq.s32.totalorder %s12, 1
    %p55 = por %p53, %p54
    %p56 = scmp.ne.s32.totalorder %s48, %s51
    %p57 = scmp.eq.s32.totalorder %s12, 0
    %p58 = por %p56, %p57
    %p59 = scmp.ne.s32.totalorder %s48, %s51
    %p60 = scmp.eq.s32.totalorder %s17, 1
    %p61 = por %p59, %p60
    %p62 = scmp.ne.s32.totalorder %s51, %s52
    %p63 = scmp.eq.s32.totalorder %s17, 0
    %p64 = por %p62, %p63
    %p65 = scmp.ne.s32.totalorder %s51, %s52
    %p66 = scmp.eq.s32.totalorder %s18, 1
    %p67 = por %p65, %p66
    %p69 = scmp.ne.s32.totalorder %s52, %s68
    %p70 = scmp.eq.s32.totalorder %s18, 0
    %p71 = por %p69, %p70
    %s73 = sadd.s32 %s72, 1
    %p76 = scmp.eq.s32.totalorder %s12, 1
    %p77 = scmp.ne.s32.totalorder %s72, %s74
    %p78 = scmp.eq.s32.totalorder %s12, 0
    %p79 = por %p77, %p78
    %p80 = scmp.ne.s32.totalorder %s72, %s74
    %p81 = scmp.eq.s32.totalorder %s17, 1
    %p82 = por %p80, %p81
    %p83 = scmp.ne.s32.totalorder %s74, %s75
    %p84 = scmp.eq.s32.totalorder %s17, 0
    %p85 = por %p83, %p84
    %p86 = scmp.ne.s32.totalorder %s74, %s75
    %p87 = scmp.eq.s32.totalorder %s18, 1
    %p88 = por %p86, %p87
    %p90 = scmp.ne.s32.totalorder %s75, %s89
    %p91 = scmp.eq.s32.totalorder %s18, 0
    %p92 = por %p90, %p91
    %s94 = sadd.s32 %s93, 1
    %p97 = scmp.eq.s32.totalorder %s12, 1
    %p98 = scmp.ne.s32.totalorder %s93, %s95
    %p99 = scmp.eq.s32.totalorder %s12, 0
    %p100 = por %p98, %p99
    %p101 = scmp.ne.s32.totalorder %s93, %s95
    %p102 = scmp.eq.s32.totalorder %s17, 1
    %p103 = por %p101, %p102
    %p104 = scmp.ne.s32.totalorder %s95, %s96
    %p105 = scmp.eq.s32.totalorder %s17, 0
    %p106 = por %p104, %p105
    %p107 = scmp.ne.s32.totalorder %s95, %s96
    %p108 = scmp.eq.s32.totalorder %s18, 1
    %p109 = por %p107, %p108
    %p111 = scmp.ne.s32.totalorder %s96, %s110
    %p112 = scmp.eq.s32.totalorder %s18, 0
    %p113 = por %p111, %p112
    %s115 = sadd.s32 %s114, 1
    %p118 = scmp.eq.s32.totalorder %s12, 1
    %p119 = scmp.ne.s32.totalorder %s114, %s116
    %p120 = scmp.eq.s32.totalorder %s12, 0
    %p121 = por %p119, %p120
    %p122 = scmp.ne.s32.totalorder %s114, %s116
    %p123 = scmp.eq.s32.totalorder %s17, 1
    %p124 = por %p122, %p123
    %p125 = scmp.ne.s32.totalorder %s116, %s117
    %p126 = scmp.eq.s32.totalorder %s17, 0
    %p127 = por %p125, %p126
    %p128 = scmp.ne.s32.totalorder %s116, %s117
    %p129 = scmp.eq.s32.totalorder %s18, 1
    %p130 = por %p128, %p129
    %p132 = scmp.ne.s32.totalorder %s117, %s131
    %p133 = scmp.eq.s32.totalorder %s18, 0
    %p134 = por %p132, %p133
    %s135 = ssub.s32 %s12, %s19
    %p136 = scmp.eq.s32.totalorder %s135, 0
    %s138 = sadd.s32 %s137, 1
    %s139 = scalar_select %p136, %s137, %s138
    %p142 = pneg %p136
    %p143 = scmp.eq.s32.totalorder %s12, 1
    %p144 = por %p142, %p143
    %p145 = scmp.ne.s32.totalorder %s137, %s140
    %p146 = scmp.eq.s32.totalorder %s12, 0
    %p147 = por %p145, %p146
    %p148 = scmp.ne.s32.totalorder %s137, %s140
    %p149 = scmp.eq.s32.totalorder %s17, 1
    %p150 = por %p148, %p149
    %p151 = scmp.ne.s32.totalorder %s140, %s141
    %p152 = scmp.eq.s32.totalorder %s17, 0
    %p153 = por %p151, %p152
    %p154 = scmp.ne.s32.totalorder %s140, %s141
    %p155 = scmp.eq.s32.totalorder %s18, 1
    %p156 = por %p154, %p155
    %p158 = scmp.ne.s32.totalorder %s141, %s157
    %p159 = scmp.eq.s32.totalorder %s18, 0
    %p160 = por %p158, %p159
    %p161 = scmp.le.s32.totalorder 1, %s12
    %p162 = scmp.lt.s32.totalorder %s12, 3
    %p163 = pnand %p161, %p162
    %p164 = pneg %p163
    // Predicated region
    $region9: #{simplex_transformer_forward.7} parent=5 // pred_check
      _
    $region10: #{simplex_transformer_forward.7} parent=5 // pred_check_branch
      %166 = sbr.rel (%p163) target = $region12
    $region11: #{simplex_transformer_forward.7} parent=5 // pred_region
      %s167 = ssub.s32 %s12, 1
      // Predicated region
      $region13: #{simplex_transformer_forward.7} parent=11 // pred_check
        %p168 = pneg %p85
      $region14: #{simplex_transformer_forward.7} parent=11 // pred_check_branch
        %170 = sbr.rel (%p168) target = $region16
      $region15: #{simplex_transformer_forward.7} parent=11 // pred_region
        _
      $region16: #{simplex_transformer_forward.7} parent=11 // pred_fallthru
        _
      // Predicated region
      $region17: #{simplex_transformer_forward.7} parent=11 // pred_check
        %p171 = pneg %p106
      $region18: #{simplex_transformer_forward.7} parent=11 // pred_check_branch
        %173 = sbr.rel (%p171) target = $region20
      $region19: #{simplex_transformer_forward.7} parent=11 // pred_region
        _
      $region20: #{simplex_transformer_forward.7} parent=11 // pred_fallthru
        _
      // Predicated region
      $region21: #{simplex_transformer_forward.7} parent=11 // pred_check
        %p174 = pneg %p127
      $region22: #{simplex_transformer_forward.7} parent=11 // pred_check_branch
        %176 = sbr.rel (%p174) target = $region24
      $region23: #{simplex_transformer_forward.7} parent=11 // pred_region
        _
      $region24: #{simplex_transformer_forward.7} parent=11 // pred_fallthru
        _
    $region12: #{simplex_transformer_forward.7} parent=5 // pred_fallthru
      _
    %p177 = scmp.lt.s32.totalorder %s12, 2
    // Predicated region
    $region25: #{simplex_transformer_forward.7} parent=5 // pred_check
      %p178 = pneg %p177
    $region26: #{simplex_transformer_forward.7} parent=5 // pred_check_branch
      %180 = sbr.rel (%p178) target = $region28
    $region27: #{simplex_transformer_forward.7} parent=5 // pred_region
      // Predicated region
      $region29: #{simplex_transformer_forward.7} parent=27 // pred_check
        %p181 = pneg %p32
      $region30: #{simplex_transformer_forward.7} parent=27 // pred_check_branch
        %183 = sbr.rel (%p181) target = $region32
      $region31: #{simplex_transformer_forward.7} parent=27 // pred_region
        %p184 = scmp.lt.s32.totalorder %s12, 1
        %s185 = scalar_select %p184, %s12, 1
        %s186 = smul.addr %s185, 8
        %s187 = scalar_lea.vmem %s0, %s186
      $region32: #{simplex_transformer_forward.7} parent=27 // pred_fallthru
        _
      // Predicated region
      $region33: #{simplex_transformer_forward.7} parent=27 // pred_check
        %p188 = pneg %p58
      $region34: #{simplex_transformer_forward.7} parent=27 // pred_check_branch
        %190 = sbr.rel (%p188) target = $region36
      $region35: #{simplex_transformer_forward.7} parent=27 // pred_region
        %p191 = scmp.lt.s32.totalorder %s12, 1
        %s192 = scalar_select %p191, %s12, 1
        %s193 = smul.addr %s192, 8
        %s194 = scalar_lea.vmem %s1, %s193
      $region36: #{simplex_transformer_forward.7} parent=27 // pred_fallthru
        _
    $region28: #{simplex_transformer_forward.7} parent=5 // pred_fallthru
      _
    %p195 = scmp.le.s32.totalorder 1, %s12
    %p196 = scmp.lt.s32.totalorder %s12, 3
    %p197 = pnand %p195, %p196
    %p198 = pneg %p197
    // Predicated region
    $region37: #{simplex_transformer_forward.7} parent=5 // pred_check
      _
    $region38: #{simplex_transformer_forward.7} parent=5 // pred_check_branch
      %200 = sbr.rel (%p197) target = $region40
    $region39: #{simplex_transformer_forward.7} parent=5 // pred_region
      %s201 = ssub.s32 %s12, 1
      %p202 = scmp.lt.s32.totalorder %s17, 1
      %s203 = scalar_select %p202, %s17, 1
      %s204 = smul.addr %s203, 8
      %s205 = scalar_lea.vmem %s0, %s204
      %p206 = pneg %p38
      %p207 = pneg %p35
      %p208 = scmp.lt.s32.totalorder %s17, 1
      %s209 = scalar_select %p208, %s17, 1
      %s210 = smul.addr %s209, 8
      %s211 = scalar_lea.vmem %s1, %s210
      %p212 = pneg %p64
      %p213 = pneg %p61
      %p214 = pneg %p85
      %p215 = pneg %p82
      %p216 = pneg %p106
      %p217 = pneg %p103
      %p218 = pneg %p127
      %p219 = pneg %p124
      %p220 = pneg %p153
      %p221 = pneg %p150
      %p222 = scmp.lt.s32.totalorder %s17, 1
      %s223 = scalar_select %p222, %s17, 1
      %s224 = smul.addr %s223, 8
      %s225 = scalar_lea.vmem %s5, %s224
      %p226 = scmp.lt.s32.totalorder %s17, 1
      %s227 = scalar_select %p226, %s17, 1
      %s228 = smul.addr %s227, 8
      %s229 = scalar_lea.vmem %s0, %s228
      %p230 = scmp.lt.s32.totalorder %s17, 1
      %s231 = scalar_select %p230, %s17, 1
      %s232 = smul.addr %s231, 8
      %s233 = scalar_lea.vmem %s1, %s232
      %p234 = scmp.lt.s32.totalorder %s17, 1
      %s235 = scalar_select %p234, %s17, 1
      %s236 = smul.addr %s235, 8
      %s237 = scalar_lea.vmem %s5, %s236
      %v239 = vld [vmem:[%s229] sm:$0xff]
      %v240 = vpack.c.bf16 %v239, %v239
      %v241 = vld [vmem:[%s2] sm:$0xf]
      %v242 = vld [vmem:[%s2 + $0x4] sm:$0xf]
      %v243 = vld [vmem:[%s2 + $0x8] sm:$0xf]
      %v244 = vld [vmem:[%s2 + $0xc] sm:$0xf]
      %v245 = vld [vmem:[%s3] sm:$0x1]
      %v247 = vlaneseq
      %v248 = vshrl.u32 %v247, 7
      %v249 = vsub.s32 0, %v248
      %v250 = vrot.slane %v245, %v249
      %v256 = vunpack.c.l.b16 %v241
      %v257 = vunpack.c.l.b16 %v242
      %v258 = vunpack.c.l.b16 %v243
      %v259 = vunpack.c.l.b16 %v244
      %v260 = vpack.c.b16 %v257, %v256
      %v261 = vpack.c.b16 %v259, %v258
      %vm264 = vcmask 261120
      %v266 = vsel %vm264, %v240, 0
      %268 = vmatprep.subr.bf16.mxu0 0
      %269 = vmatpush1.bf16.msra.mxu0 %v260
      %270 = vmatprep.subr.bf16.mxu0 0
      %271 = vmatpush1.bf16.msra.mxu0 %v261
      %272 = vmatprep.subr.bf16.mxu0 0
      %273 = vmatpush1.bf16.msra.mxu0 0
      %274 = vmatprep.subr.bf16.mxu0 0
      %275 = vmatpush1.bf16.msra.mxu0 0
      %276 = vmatprep.subr.bf16.mxu0 0
      %277 = vmatpush1.bf16.msra.mxu0 0
      %278 = vmatprep.subr.bf16.mxu0 0
      %279 = vmatpush1.bf16.msra.mxu0 0
      %280 = vmatprep.subr.bf16.mxu0 0
      %281 = vmatpush1.bf16.msra.mxu0 0
      %282 = vmatprep.subr.bf16.mxu0 0
      %283 = vmatpush1.bf16.msra.mxu0 0
      %284 = vmatprep.subr.bf16.mxu0 0
      %285 = vmatpush1.bf16.msra.mxu0 0
      %286 = vmatprep.subr.bf16.mxu0 0
      %287 = vmatpush1.bf16.msra.mxu0 0
      %288 = vmatprep.subr.bf16.mxu0 0
      %289 = vmatpush1.bf16.msra.mxu0 0
      %290 = vmatprep.subr.bf16.mxu0 0
      %291 = vmatpush1.bf16.msra.mxu0 0
      %292 = vmatprep.subr.bf16.mxu0 0
      %293 = vmatpush1.bf16.msra.mxu0 0
      %294 = vmatprep.subr.bf16.mxu0 0
      %295 = vmatpush1.bf16.msra.mxu0 0
      %296 = vmatprep.subr.bf16.mxu0 0
      %297 = vmatpush1.bf16.msra.mxu0 0
      %298 = vmatprep.subr.bf16.mxu0 0
      %299 = vmatpush1.bf16.msra.mxu0 0
      %300 = vmatprep.mubr.bf16.mxu0 0
      %301 = vmatmul.mubr.bf16.gmra.mrb[0].mxu0 %v266
      %v302 = vpop.f32.mrb[0].mxu0
      %v303 = vadd.f32 %v250, %v302
      %v304 = vpop.f32.mrb[0].mxu0
      %v305 = vpop.f32.mrb[0].mxu0
      %v306 = vpop.f32.mrb[0].mxu0
      %307 = vdwg.mxu0
      %s308 = sld [smem:[#allocation2]]
      %v309 = vld [vmem:[%s233] sm:$0xff]
      %v310 = vstv %s308
      %v311 = vmul.f32 %v310, %v309
      %v312 = vadd.f32 %v303, %v311
      %vm313 = vcmask 31744
      %314 = vst.msk [vmem:[%s237] sm:$0xff] %vm313, %v312
      %p315 = scmp.lt.s32.totalorder %s17, 1
      %s316 = scalar_select %p315, %s17, 1
      %s317 = smul.addr %s316, 8
      %s318 = scalar_lea.vmem %s5, %s317
      // Predicated region
      $region41: #{simplex_transformer_forward.7} parent=39 // pred_check
        %p319 = pneg %p150
      $region42: #{simplex_transformer_forward.7} parent=39 // pred_check_branch
        %321 = sbr.rel (%p319) target = $region44
      $region43: #{simplex_transformer_forward.7} parent=39 // pred_region
        _
      $region44: #{simplex_transformer_forward.7} parent=39 // pred_fallthru
        _
    $region40: #{simplex_transformer_forward.7} parent=5 // pred_fallthru
      _
    %p322 = scmp.le.s32.totalorder 2, %s12
    // Predicated region
    $region45: #{simplex_transformer_forward.7} parent=5 // pred_check
      %p323 = pneg %p322
    $region46: #{simplex_transformer_forward.7} parent=5 // pred_check_branch
      %325 = sbr.rel (%p323) target = $region48
    $region47: #{simplex_transformer_forward.7} parent=5 // pred_region
      %s326 = ssub.s32 %s12, 2
      // Predicated region
      $region49: #{simplex_transformer_forward.7} parent=47 // pred_check
        %p327 = pneg %p156
      $region50: #{simplex_transformer_forward.7} parent=47 // pred_check_branch
        %329 = sbr.rel (%p327) target = $region52
      $region51: #{simplex_transformer_forward.7} parent=47 // pred_region
        %p330 = scmp.lt.s32.totalorder %s18, 1
        %s331 = scalar_select %p330, %s18, 1
        %s332 = smul.addr %s331, 8
        %s333 = scalar_lea.vmem %s5, %s332
      $region52: #{simplex_transformer_forward.7} parent=47 // pred_fallthru
        _
    $region48: #{simplex_transformer_forward.7} parent=5 // pred_fallthru
      _
  $region6: #{simplex_transformer_forward.7} parent=0 // loop_footer
    %s16 = sadd.s32 1, %s12
  $region7: #{simplex_transformer_forward.7} parent=0 // loop_footer_branch
    %11 = sbr.rel target = $region3
  $region8: #{simplex_transformer_forward.7} parent=0 // loop_exit
    _

// kernel: simplex_transformer_forward.4
$region0: #{simplex_transformer_forward.4}
  #allocation0 [shape = 'u32[]', space=smem, size = 0x4, offset = 0x4, fixed_abs, tag = 'smem constant byte address 0x4 - core index']
  #allocation1 [shape = 'u32[144,128]{1,0:T(1,128)}', space=vmem, size = 0x12000, scoped, tag = 'internal scratch']
  %s0 = inlined_call_operand.vmem [shape: f32[2,8,4], index: 0, kind: input, shape index: {}]
  %s1 = inlined_call_operand.vmem [shape: s32[2,8,1], index: 1, kind: input, shape index: {}]
  %s2 = inlined_call_operand.vmem [shape: bf16[4,32], index: 2, kind: input, shape index: {}]
  %s3 = inlined_call_operand.vmem [shape: f32[1,32], index: 3, kind: input, shape index: {}]
  %s4 = inlined_call_operand.vmem [shape: bf16[16,32], index: 4, kind: input, shape index: {}]
  %s5 = inlined_call_operand.vmem [shape: f32[2,8,32], index: 5, kind: output, shape index: {}]
  %s6 = sld [smem:[#allocation0]]
  $region53: #{simplex_transformer_forward.4} parent=0
    _
  %s8 = ssub.s32 1, %s6
  %s9 = scalar_select 0, %s8, %s6
  loop: start=0, step=1, limit=4
  $region2: #{simplex_transformer_forward.4} parent=0 // loop_pre_header
    _
  $region3: #{simplex_transformer_forward.4} parent=0 // loop_header
    %s11 = sphi 0, %s15
    %p12 = scmp.ge.s32.totalorder %s11, 4
    %s21 = sphi 0, %s23
    %s24 = sphi 0, %s21
    %s25 = sphi 0, %s24
    %s41 = sphi 0, %s25
    %s47 = sphi 0, %s49
    %s50 = sphi 0, %s47
    %s51 = sphi 0, %s50
    %s67 = sphi 0, %s51
    %s71 = sphi 0, %s71
    %s73 = sphi 0, %s71
    %s74 = sphi 0, %s73
    %s88 = sphi 0, %s74
    %s92 = sphi 0, %s92
    %s94 = sphi 0, %s92
    %s95 = sphi 0, %s94
    %s109 = sphi 0, %s95
    %s113 = sphi 0, %s113
    %s115 = sphi 0, %s113
    %s116 = sphi 0, %s115
    %s130 = sphi 0, %s116
    %s136 = sphi 0, %s138
    %s139 = sphi 0, %s136
    %s140 = sphi 0, %s139
    %s156 = sphi 0, %s140
  $region4: #{simplex_transformer_forward.4} parent=0 // loop_header_branch
    %14 = sbr.rel (%p12) target = $region8
  $region5: #{simplex_transformer_forward.4} parent=0 // loop_body
    %s16 = ssub.s32 %s11, 1
    %s17 = ssub.s32 %s11, 2
    %s18 = sadd.s32 %s11, 1
    %s19 = ssub.s32 %s11, %s18
    %p20 = scmp.eq.s32.totalorder %s19, 0
    %s22 = sadd.s32 %s21, 1
    %s23 = scalar_select %p20, %s21, %s22
    %p26 = pneg %p20
    %p27 = scmp.eq.s32.totalorder %s11, 1
    %p28 = por %p26, %p27
    %p29 = scmp.ne.s32.totalorder %s21, %s24
    %p30 = scmp.eq.s32.totalorder %s11, 0
    %p31 = por %p29, %p30
    %p32 = scmp.ne.s32.totalorder %s21, %s24
    %p33 = scmp.eq.s32.totalorder %s16, 1
    %p34 = por %p32, %p33
    %p35 = scmp.ne.s32.totalorder %s24, %s25
    %p36 = scmp.eq.s32.totalorder %s16, 0
    %p37 = por %p35, %p36
    %p38 = scmp.ne.s32.totalorder %s24, %s25
    %p39 = scmp.eq.s32.totalorder %s17, 1
    %p40 = por %p38, %p39
    %p42 = scmp.ne.s32.totalorder %s25, %s41
    %p43 = scmp.eq.s32.totalorder %s17, 0
    %p44 = por %p42, %p43
    %s45 = ssub.s32 %s11, %s18
    %p46 = scmp.eq.s32.totalorder %s45, 0
    %s48 = sadd.s32 %s47, 1
    %s49 = scalar_select %p46, %s47, %s48
    %p52 = pneg %p46
    %p53 = scmp.eq.s32.totalorder %s11, 1
    %p54 = por %p52, %p53
    %p55 = scmp.ne.s32.totalorder %s47, %s50
    %p56 = scmp.eq.s32.totalorder %s11, 0
    %p57 = por %p55, %p56
    %p58 = scmp.ne.s32.totalorder %s47, %s50
    %p59 = scmp.eq.s32.totalorder %s16, 1
    %p60 = por %p58, %p59
    %p61 = scmp.ne.s32.totalorder %s50, %s51
    %p62 = scmp.eq.s32.totalorder %s16, 0
    %p63 = por %p61, %p62
    %p64 = scmp.ne.s32.totalorder %s50, %s51
    %p65 = scmp.eq.s32.totalorder %s17, 1
    %p66 = por %p64, %p65
    %p68 = scmp.ne.s32.totalorder %s51, %s67
    %p69 = scmp.eq.s32.totalorder %s17, 0
    %p70 = por %p68, %p69
    %s72 = sadd.s32 %s71, 1
    %p75 = scmp.eq.s32.totalorder %s11, 1
    %p76 = scmp.ne.s32.totalorder %s71, %s73
    %p77 = scmp.eq.s32.totalorder %s11, 0
    %p78 = por %p76, %p77
    %p79 = scmp.ne.s32.totalorder %s71, %s73
    %p80 = scmp.eq.s32.totalorder %s16, 1
    %p81 = por %p79, %p80
    %p82 = scmp.ne.s32.totalorder %s73, %s74
    %p83 = scmp.eq.s32.totalorder %s16, 0
    %p84 = por %p82, %p83
    %p85 = scmp.ne.s32.totalorder %s73, %s74
    %p86 = scmp.eq.s32.totalorder %s17, 1
    %p87 = por %p85, %p86
    %p89 = scmp.ne.s32.totalorder %s74, %s88
    %p90 = scmp.eq.s32.totalorder %s17, 0
    %p91 = por %p89, %p90
    %s93 = sadd.s32 %s92, 1
    %p96 = scmp.eq.s32.totalorder %s11, 1
    %p97 = scmp.ne.s32.totalorder %s92, %s94
    %p98 = scmp.eq.s32.totalorder %s11, 0
    %p99 = por %p97, %p98
    %p100 = scmp.ne.s32.totalorder %s92, %s94
    %p101 = scmp.eq.s32.totalorder %s16, 1
    %p102 = por %p100, %p101
    %p103 = scmp.ne.s32.totalorder %s94, %s95
    %p104 = scmp.eq.s32.totalorder %s16, 0
    %p105 = por %p103, %p104
    %p106 = scmp.ne.s32.totalorder %s94, %s95
    %p107 = scmp.eq.s32.totalorder %s17, 1
    %p108 = por %p106, %p107
    %p110 = scmp.ne.s32.totalorder %s95, %s109
    %p111 = scmp.eq.s32.totalorder %s17, 0
    %p112 = por %p110, %p111
    %s114 = sadd.s32 %s113, 1
    %p117 = scmp.eq.s32.totalorder %s11, 1
    %p118 = scmp.ne.s32.totalorder %s113, %s115
    %p119 = scmp.eq.s32.totalorder %s11, 0
    %p120 = por %p118, %p119
    %p121 = scmp.ne.s32.totalorder %s113, %s115
    %p122 = scmp.eq.s32.totalorder %s16, 1
    %p123 = por %p121, %p122
    %p124 = scmp.ne.s32.totalorder %s115, %s116
    %p125 = scmp.eq.s32.totalorder %s16, 0
    %p126 = por %p124, %p125
    %p127 = scmp.ne.s32.totalorder %s115, %s116
    %p128 = scmp.eq.s32.totalorder %s17, 1
    %p129 = por %p127, %p128
    %p131 = scmp.ne.s32.totalorder %s116, %s130
    %p132 = scmp.eq.s32.totalorder %s17, 0
    %p133 = por %p131, %p132
    %s134 = ssub.s32 %s11, %s18
    %p135 = scmp.eq.s32.totalorder %s134, 0
    %s137 = sadd.s32 %s136, 1
    %s138 = scalar_select %p135, %s136, %s137
    %p141 = pneg %p135
    %p142 = scmp.eq.s32.totalorder %s11, 1
    %p143 = por %p141, %p142
    %p144 = scmp.ne.s32.totalorder %s136, %s139
    %p145 = scmp.eq.s32.totalorder %s11, 0
    %p146 = por %p144, %p145
    %p147 = scmp.ne.s32.totalorder %s136, %s139
    %p148 = scmp.eq.s32.totalorder %s16, 1
    %p149 = por %p147, %p148
    %p150 = scmp.ne.s32.totalorder %s139, %s140
    %p151 = scmp.eq.s32.totalorder %s16, 0
    %p152 = por %p150, %p151
    %p153 = scmp.ne.s32.totalorder %s139, %s140
    %p154 = scmp.eq.s32.totalorder %s17, 1
    %p155 = por %p153, %p154
    %p157 = scmp.ne.s32.totalorder %s140, %s156
    %p158 = scmp.eq.s32.totalorder %s17, 0
    %p159 = por %p157, %p158
    %p160 = scmp.le.s32.totalorder 1, %s11
    %p161 = scmp.lt.s32.totalorder %s11, 3
    %p162 = pnand %p160, %p161
    %p163 = pneg %p162
    // Predicated region
    $region9: #{simplex_transformer_forward.4} parent=5 // pred_check
      _
    $region10: #{simplex_transformer_forward.4} parent=5 // pred_check_branch
      %165 = sbr.rel (%p162) target = $region12
    $region11: #{simplex_transformer_forward.4} parent=5 // pred_region
      %s166 = ssub.s32 %s11, 1
      // Predicated region
      $region13: #{simplex_transformer_forward.4} parent=11 // pred_check
        %p167 = pneg %p84
      $region14: #{simplex_transformer_forward.4} parent=11 // pred_check_branch
        %169 = sbr.rel (%p167) target = $region16
      $region15: #{simplex_transformer_forward.4} parent=11 // pred_region
        _
      $region16: #{simplex_transformer_forward.4} parent=11 // pred_fallthru
        _
      // Predicated region
      $region17: #{simplex_transformer_forward.4} parent=11 // pred_check
        %p170 = pneg %p105
      $region18: #{simplex_transformer_forward.4} parent=11 // pred_check_branch
        %172 = sbr.rel (%p170) target = $region20
      $region19: #{simplex_transformer_forward.4} parent=11 // pred_region
        _
      $region20: #{simplex_transformer_forward.4} parent=11 // pred_fallthru
        _
      // Predicated region
      $region21: #{simplex_transformer_forward.4} parent=11 // pred_check
        %p173 = pneg %p126
      $region22: #{simplex_transformer_forward.4} parent=11 // pred_check_branch
        %175 = sbr.rel (%p173) target = $region24
      $region23: #{simplex_transformer_forward.4} parent=11 // pred_region
        _
      $region24: #{simplex_transformer_forward.4} parent=11 // pred_fallthru
        _
    $region12: #{simplex_transformer_forward.4} parent=5 // pred_fallthru
      _
    %p176 = scmp.lt.s32.totalorder %s11, 2
    // Predicated region
    $region25: #{simplex_transformer_forward.4} parent=5 // pred_check
      %p177 = pneg %p176
    $region26: #{simplex_transformer_forward.4} parent=5 // pred_check_branch
      %179 = sbr.rel (%p177) target = $region28
    $region27: #{simplex_transformer_forward.4} parent=5 // pred_region
      // Predicated region
      $region29: #{simplex_transformer_forward.4} parent=27 // pred_check
        %p180 = pneg %p31
      $region30: #{simplex_transformer_forward.4} parent=27 // pred_check_branch
        %182 = sbr.rel (%p180) target = $region32
      $region31: #{simplex_transformer_forward.4} parent=27 // pred_region
        %p183 = scmp.lt.s32.totalorder %s11, 1
        %s184 = scalar_select %p183, %s11, 1
        %s185 = smul.addr %s184, 8
        %s186 = scalar_lea.vmem %s0, %s185
      $region32: #{simplex_transformer_forward.4} parent=27 // pred_fallthru
        _
      // Predicated region
      $region33: #{simplex_transformer_forward.4} parent=27 // pred_check
        %p187 = pneg %p57
      $region34: #{simplex_transformer_forward.4} parent=27 // pred_check_branch
        %189 = sbr.rel (%p187) target = $region36
      $region35: #{simplex_transformer_forward.4} parent=27 // pred_region
        %p190 = scmp.lt.s32.totalorder %s11, 1
        %s191 = scalar_select %p190, %s11, 1
        %s192 = smul.addr %s191, 8
        %s193 = scalar_lea.vmem %s1, %s192
      $region36: #{simplex_transformer_forward.4} parent=27 // pred_fallthru
        _
    $region28: #{simplex_transformer_forward.4} parent=5 // pred_fallthru
      _
    %p194 = scmp.le.s32.totalorder 1, %s11
    %p195 = scmp.lt.s32.totalorder %s11, 3
    %p196 = pnand %p194, %p195
    %p197 = pneg %p196
    // Predicated region
    $region37: #{simplex_transformer_forward.4} parent=5 // pred_check
      _
    $region38: #{simplex_transformer_forward.4} parent=5 // pred_check_branch
      %199 = sbr.rel (%p196) target = $region40
    $region39: #{simplex_transformer_forward.4} parent=5 // pred_region
      %s200 = ssub.s32 %s11, 1
      %p201 = scmp.lt.s32.totalorder %s16, 1
      %s202 = scalar_select %p201, %s16, 1
      %s203 = smul.addr %s202, 8
      %s204 = scalar_lea.vmem %s0, %s203
      %p205 = pneg %p37
      %p206 = pneg %p34
      %p207 = scmp.lt.s32.totalorder %s16, 1
      %s208 = scalar_select %p207, %s16, 1
      %s209 = smul.addr %s208, 8
      %s210 = scalar_lea.vmem %s1, %s209
      %p211 = pneg %p63
      %p212 = pneg %p60
      %p213 = pneg %p84
      %p214 = pneg %p81
      %p215 = pneg %p105
      %p216 = pneg %p102
      %p217 = pneg %p126
      %p218 = pneg %p123
      %p219 = pneg %p152
      %p220 = pneg %p149
      %p221 = scmp.lt.s32.totalorder %s16, 1
      %s222 = scalar_select %p221, %s16, 1
      %s223 = smul.addr %s222, 8
      %s224 = scalar_lea.vmem %s5, %s223
      %p225 = scmp.lt.s32.totalorder %s16, 1
      %s226 = scalar_select %p225, %s16, 1
      %s227 = smul.addr %s226, 8
      %s228 = scalar_lea.vmem %s0, %s227
      %p229 = scmp.lt.s32.totalorder %s16, 1
      %s230 = scalar_select %p229, %s16, 1
      %s231 = smul.addr %s230, 8
      %s232 = scalar_lea.vmem %s1, %s231
      %p233 = scmp.lt.s32.totalorder %s16, 1
      %s234 = scalar_select %p233, %s16, 1
      %s235 = smul.addr %s234, 8
      %s236 = scalar_lea.vmem %s5, %s235
      %v238 = vld [vmem:[%s228] sm:$0xff]
      %v239 = vpack.c.bf16 %v238, %v238
      %v240 = vld [vmem:[%s2] sm:$0x3]
      %v241 = vld [vmem:[%s3] sm:$0x1]
      %v243 = vlaneseq
      %v244 = vshrl.u32 %v243, 7
      %v245 = vsub.s32 0, %v244
      %v246 = vrot.slane %v241, %v245
      %vm248 = vcmask 31744
      %v250 = vsel %vm248, %v239, 0
      %vm252 = vcmask 1041408
      %v254 = vsel %vm252, %v240, 0
      %256 = vmatprep.subr.bf16.mxu0 0
      %257 = vmatpush1.bf16.msra.mxu0 %v254
      %258 = vmatprep.subr.bf16.mxu0 0
      %259 = vmatpush1.bf16.msra.mxu0 0
      %260 = vmatprep.subr.bf16.mxu0 0
      %261 = vmatpush1.bf16.msra.mxu0 0
      %262 = vmatprep.subr.bf16.mxu0 0
      %263 = vmatpush1.bf16.msra.mxu0 0
      %264 = vmatprep.subr.bf16.mxu0 0
      %265 = vmatpush1.bf16.msra.mxu0 0
      %266 = vmatprep.subr.bf16.mxu0 0
      %267 = vmatpush1.bf16.msra.mxu0 0
      %268 = vmatprep.subr.bf16.mxu0 0
      %269 = vmatpush1.bf16.msra.mxu0 0
      %270 = vmatprep.subr.bf16.mxu0 0
      %271 = vmatpush1.bf16.msra.mxu0 0
      %272 = vmatprep.subr.bf16.mxu0 0
      %273 = vmatpush1.bf16.msra.mxu0 0
      %274 = vmatprep.subr.bf16.mxu0 0
      %275 = vmatpush1.bf16.msra.mxu0 0
      %276 = vmatprep.subr.bf16.mxu0 0
      %277 = vmatpush1.bf16.msra.mxu0 0
      %278 = vmatprep.subr.bf16.mxu0 0
      %279 = vmatpush1.bf16.msra.mxu0 0
      %280 = vmatprep.subr.bf16.mxu0 0
      %281 = vmatpush1.bf16.msra.mxu0 0
      %282 = vmatprep.subr.bf16.mxu0 0
      %283 = vmatpush1.bf16.msra.mxu0 0
      %284 = vmatprep.subr.bf16.mxu0 0
      %285 = vmatpush1.bf16.msra.mxu0 0
      %286 = vmatprep.subr.bf16.mxu0 0
      %287 = vmatpush1.bf16.msra.mxu0 0
      %288 = vmatprep.mubr.bf16.mxu0 0
      %289 = vmatmul.mubr.bf16.gmra.mrb[0].mxu0 %v250
      %v290 = vpop.f32.mrb[0].mxu0
      %v291 = vadd.f32 %v246, %v290
      %v292 = vpop.f32.mrb[0].mxu0
      %v293 = vpop.f32.mrb[0].mxu0
      %v294 = vpop.f32.mrb[0].mxu0
      %295 = vdwg.mxu0
      %v296 = vld [vmem:[%s232] sm:$0xff]
      %v297 = vlaneseq
      %v298 = vand.u32 %v297, 127
      %299 = vset.pattern.permute.xlu0 0
      %300 = vperm.xlu0 %299, %v296
      %v301 = vpop.permute.xlu0 %300
      %vm302 = vcmp.eq.s32.totalorder %v301, %v298
      %v303 = vsel %vm302, 1, 0
      %v304 = vcvt.s32.f32 %v303
      %v305 = vpack.c.bf16 %v304, %v304
      %v306 = vld [vmem:[%s4] sm:$0xf]
      %v307 = vld [vmem:[%s4 + $0x4] sm:$0xf]
      %v310 = vunpack.c.l.b16 %v306
      %v311 = vunpack.c.l.b16 %v307
      %v312 = vpack.c.b16 %v311, %v310
      %vm314 = vcmask 130048
      %v316 = vsel %vm314, %v305, 0
      %318 = vmatprep.subr.bf16.mxu0 0
      %319 = vmatpush1.bf16.msra.mxu0 %v312
      %320 = vmatprep.subr.bf16.mxu0 0
      %321 = vmatpush1.bf16.msra.mxu0 0
      %322 = vmatprep.subr.bf16.mxu0 0
      %323 = vmatpush1.bf16.msra.mxu0 0
      %324 = vmatprep.subr.bf16.mxu0 0
      %325 = vmatpush1.bf16.msra.mxu0 0
      %326 = vmatprep.subr.bf16.mxu0 0
      %327 = vmatpush1.bf16.msra.mxu0 0
      %328 = vmatprep.subr.bf16.mxu0 0
      %329 = vmatpush1.bf16.msra.mxu0 0
      %330 = vmatprep.subr.bf16.mxu0 0
      %331 = vmatpush1.bf16.msra.mxu0 0
      %332 = vmatprep.subr.bf16.mxu0 0
      %333 = vmatpush1.bf16.msra.mxu0 0
      %334 = vmatprep.subr.bf16.mxu0 0
      %335 = vmatpush1.bf16.msra.mxu0 0
      %336 = vmatprep.subr.bf16.mxu0 0
      %337 = vmatpush1.bf16.msra.mxu0 0
      %338 = vmatprep.subr.bf16.mxu0 0
      %339 = vmatpush1.bf16.msra.mxu0 0
      %340 = vmatprep.subr.bf16.mxu0 0
      %341 = vmatpush1.bf16.msra.mxu0 0
      %342 = vmatprep.subr.bf16.mxu0 0
      %343 = vmatpush1.bf16.msra.mxu0 0
      %344 = vmatprep.subr.bf16.mxu0 0
      %345 = vmatpush1.bf16.msra.mxu0 0
      %346 = vmatprep.subr.bf16.mxu0 0
      %347 = vmatpush1.bf16.msra.mxu0 0
      %348 = vmatprep.subr.bf16.mxu0 0
      %349 = vmatpush1.bf16.msra.mxu0 0
      %350 = vmatprep.mubr.bf16.mxu0 0
      %351 = vmatmul.mubr.bf16.gmra.mrb[0].mxu0 %v316
      %v352 = vpop.f32.mrb[0].mxu0
      %v353 = vadd.f32 0.0, %v352
      %v354 = vpop.f32.mrb[0].mxu0
      %v355 = vpop.f32.mrb[0].mxu0
      %v356 = vpop.f32.mrb[0].mxu0
      %357 = vdwg.mxu0
      %v358 = vadd.f32 %v291, %v353
      %vm359 = vcmask 261120
      %360 = vst.msk [vmem:[%s236] sm:$0xff] %vm359, %v358
      %p361 = scmp.lt.s32.totalorder %s16, 1
      %s362 = scalar_select %p361, %s16, 1
      %s363 = smul.addr %s362, 8
      %s364 = scalar_lea.vmem %s5, %s363
      // Predicated region
      $region41: #{simplex_transformer_forward.4} parent=39 // pred_check
        %p365 = pneg %p149
      $region42: #{simplex_transformer_forward.4} parent=39 // pred_check_branch
        %367 = sbr.rel (%p365) target = $region44
      $region43: #{simplex_transformer_forward.4} parent=39 // pred_region
        _
      $region44: #{simplex_transformer_forward.4} parent=39 // pred_fallthru
        _
    $region40: #{simplex_transformer_forward.4} parent=5 // pred_fallthru
      _
    %p368 = scmp.le.s32.totalorder 2, %s11
    // Predicated region
    $region45: #{simplex_transformer_forward.4} parent=5 // pred_check
      %p369 = pneg %p368
    $region46: #{simplex_transformer_forward.4} parent=5 // pred_check_branch
      %371 = sbr.rel (%p369) target = $region48
    $region47: #{simplex_transformer_forward.4} parent=5 // pred_region
      %s372 = ssub.s32 %s11, 2
      // Predicated region
      $region49: #{simplex_transformer_forward.4} parent=47 // pred_check
        %p373 = pneg %p155
      $region50: #{simplex_transformer_forward.4} parent=47 // pred_check_branch
        %375 = sbr.rel (%p373) target = $region52
      $region51: #{simplex_transformer_forward.4} parent=47 // pred_region
        %p376 = scmp.lt.s32.totalorder %s17, 1
        %s377 = scalar_select %p376, %s17, 1
        %s378 = smul.addr %s377, 8
        %s379 = scalar_lea.vmem %s5, %s378
      $region52: #{simplex_transformer_forward.4} parent=47 // pred_fallthru
        _
    $region48: #{simplex_transformer_forward.4} parent=5 // pred_fallthru
      _
  $region6: #{simplex_transformer_forward.4} parent=0 // loop_footer
    %s15 = sadd.s32 1, %s11
  $region7: #{simplex_transformer_forward.4} parent=0 // loop_footer_branch
    %10 = sbr.rel target = $region3
  $region8: #{simplex_transformer_forward.4} parent=0 // loop_exit
    _

// kernel: simplex_transformer_forward.5
$region0: #{simplex_transformer_forward.5}
  #allocation0 [shape = 'u32[]', space=smem, size = 0x4, offset = 0x4, fixed_abs, tag = 'smem constant byte address 0x4 - core index']
  #allocation1 [shape = 'u32[144,128]{1,0:T(1,128)}', space=vmem, size = 0x12000, scoped, tag = 'internal scratch']
  %s0 = inlined_call_operand.vmem [shape: f32[2,8,32], index: 0, kind: input, shape index: {}]
  %s1 = inlined_call_operand.vmem [shape: f32[1,32], index: 1, kind: input, shape index: {}]
  %s2 = inlined_call_operand.vmem [shape: f32[1,32], index: 2, kind: input, shape index: {}]
  %s3 = inlined_call_operand.vmem [shape: bf16[32,96], index: 3, kind: input, shape index: {}]
  %s4 = inlined_call_operand.vmem [shape: f32[1,96], index: 4, kind: input, shape index: {}]
  %s5 = inlined_call_operand.vmem [shape: bf16[32,32], index: 5, kind: input, shape index: {}]
  %s6 = inlined_call_operand.vmem [shape: f32[1,32], index: 6, kind: input, shape index: {}]
  %s7 = inlined_call_operand.vmem [shape: f32[1,32], index: 7, kind: input, shape index: {}]
  %s8 = inlined_call_operand.vmem [shape: f32[1,32], index: 8, kind: input, shape index: {}]
  %s9 = inlined_call_operand.vmem [shape: bf16[32,128], index: 9, kind: input, shape index: {}]
  %s10 = inlined_call_operand.vmem [shape: f32[1,128], index: 10, kind: input, shape index: {}]
  %s11 = inlined_call_operand.vmem [shape: bf16[128,32], index: 11, kind: input, shape index: {}]
  %s12 = inlined_call_operand.vmem [shape: f32[1,32], index: 12, kind: input, shape index: {}]
  %s13 = inlined_call_operand.vmem [shape: f32[2], index: 13, kind: input, shape index: {}]
  %s14 = inlined_call_operand.vmem [shape: f32[2,8,32], index: 14, kind: output, shape index: {}]
  %s15 = sld [smem:[#allocation0]]
  $region93: #{simplex_transformer_forward.5} parent=0
    _
  %s17 = ssub.s32 1, %s15
  %s18 = scalar_select 0, %s17, %s15
  $region1: #{simplex_transformer_forward.5} parent=0
    #allocation2 [shape = 'u8[512]{0}', space=smem, size = 0x200, scoped, tag = 'input window, operand 13, single buffered']
    #allocation3 [shape = 's32[2]{0}', space=sflag, size = 0x8, scoped, tag = 'scoped memory for simplex_transformer_forward.5']
    %19 = vsyncpa [#allocation3], 0
    loop: start=0, step=1, limit=4
    $region2: #{simplex_transformer_forward.5} parent=1 // loop_pre_header
      _
    $region3: #{simplex_transformer_forward.5} parent=1 // loop_header
      %s21 = sphi 0, %s25
      %p22 = scmp.ge.s32.totalorder %s21, 4
      %s31 = sphi 0, %s33
      %s34 = sphi 0, %s31
      %s35 = sphi 0, %s34
      %s51 = sphi 0, %s35
      %s55 = sphi 0, %s55
      %s57 = sphi 0, %s55
      %s58 = sphi 0, %s57
      %s72 = sphi 0, %s58
      %s76 = sphi 0, %s76
      %s78 = sphi 0, %s76
      %s79 = sphi 0, %s78
      %s93 = sphi 0, %s79
      %s97 = sphi 0, %s97
      %s99 = sphi 0, %s97
      %s100 = sphi 0, %s99
      %s114 = sphi 0, %s100
      %s118 = sphi 0, %s118
      %s120 = sphi 0, %s118
      %s121 = sphi 0, %s120
      %s135 = sphi 0, %s121
      %s139 = sphi 0, %s139
      %s141 = sphi 0, %s139
      %s142 = sphi 0, %s141
      %s156 = sphi 0, %s142
      %s160 = sphi 0, %s160
      %s162 = sphi 0, %s160
      %s163 = sphi 0, %s162
      %s177 = sphi 0, %s163
      %s181 = sphi 0, %s181
      %s183 = sphi 0, %s181
      %s184 = sphi 0, %s183
      %s198 = sphi 0, %s184
      %s202 = sphi 0, %s202
      %s204 = sphi 0, %s202
      %s205 = sphi 0, %s204
      %s219 = sphi 0, %s205
      %s223 = sphi 0, %s223
      %s225 = sphi 0, %s223
      %s226 = sphi 0, %s225
      %s240 = sphi 0, %s226
      %s244 = sphi 0, %s244
      %s246 = sphi 0, %s244
      %s247 = sphi 0, %s246
      %s261 = sphi 0, %s247
      %s265 = sphi 0, %s265
      %s267 = sphi 0, %s265
      %s268 = sphi 0, %s267
      %s282 = sphi 0, %s268
      %s286 = sphi 0, %s286
      %s288 = sphi 0, %s286
      %s289 = sphi 0, %s288
      %s303 = sphi 0, %s289
      %s307 = sphi 0, %s307
      %s309 = sphi 0, %s307
      %s310 = sphi 0, %s309
      %s324 = sphi 0, %s310
      %s330 = sphi 0, %s332
      %s333 = sphi 0, %s330
      %s334 = sphi 0, %s333
      %s350 = sphi 0, %s334
    $region4: #{simplex_transformer_forward.5} parent=1 // loop_header_branch
      %24 = sbr.rel (%p22) target = $region8
    $region5: #{simplex_transformer_forward.5} parent=1 // loop_body
      %s26 = ssub.s32 %s21, 1
      %s27 = ssub.s32 %s21, 2
      %s28 = sadd.s32 %s21, 1
      %s29 = ssub.s32 %s21, %s28
      %p30 = scmp.eq.s32.totalorder %s29, 0
      %s32 = sadd.s32 %s31, 1
      %s33 = scalar_select %p30, %s31, %s32
      %p36 = pneg %p30
      %p37 = scmp.eq.s32.totalorder %s21, 1
      %p38 = por %p36, %p37
      %p39 = scmp.ne.s32.totalorder %s31, %s34
      %p40 = scmp.eq.s32.totalorder %s21, 0
      %p41 = por %p39, %p40
      %p42 = scmp.ne.s32.totalorder %s31, %s34
      %p43 = scmp.eq.s32.totalorder %s26, 1
      %p44 = por %p42, %p43
      %p45 = scmp.ne.s32.totalorder %s34, %s35
      %p46 = scmp.eq.s32.totalorder %s26, 0
      %p47 = por %p45, %p46
      %p48 = scmp.ne.s32.totalorder %s34, %s35
      %p49 = scmp.eq.s32.totalorder %s27, 1
      %p50 = por %p48, %p49
      %p52 = scmp.ne.s32.totalorder %s35, %s51
      %p53 = scmp.eq.s32.totalorder %s27, 0
      %p54 = por %p52, %p53
      %s56 = sadd.s32 %s55, 1
      %p59 = scmp.eq.s32.totalorder %s21, 1
      %p60 = scmp.ne.s32.totalorder %s55, %s57
      %p61 = scmp.eq.s32.totalorder %s21, 0
      %p62 = por %p60, %p61
      %p63 = scmp.ne.s32.totalorder %s55, %s57
      %p64 = scmp.eq.s32.totalorder %s26, 1
      %p65 = por %p63, %p64
      %p66 = scmp.ne.s32.totalorder %s57, %s58
      %p67 = scmp.eq.s32.totalorder %s26, 0
      %p68 = por %p66, %p67
      %p69 = scmp.ne.s32.totalorder %s57, %s58
      %p70 = scmp.eq.s32.totalorder %s27, 1
      %p71 = por %p69, %p70
      %p73 = scmp.ne.s32.totalorder %s58, %s72
      %p74 = scmp.eq.s32.totalorder %s27, 0
      %p75 = por %p73, %p74
      %s77 = sadd.s32 %s76, 1
      %p80 = scmp.eq.s32.totalorder %s21, 1
      %p81 = scmp.ne.s32.totalorder %s76, %s78
      %p82 = scmp.eq.s32.totalorder %s21, 0
      %p83 = por %p81, %p82
      %p84 = scmp.ne.s32.totalorder %s76, %s78
      %p85 = scmp.eq.s32.totalorder %s26, 1
      %p86 = por %p84, %p85
      %p87 = scmp.ne.s32.totalorder %s78, %s79
      %p88 = scmp.eq.s32.totalorder %s26, 0
      %p89 = por %p87, %p88
      %p90 = scmp.ne.s32.totalorder %s78, %s79
      %p91 = scmp.eq.s32.totalorder %s27, 1
      %p92 = por %p90, %p91
      %p94 = scmp.ne.s32.totalorder %s79, %s93
      %p95 = scmp.eq.s32.totalorder %s27, 0
      %p96 = por %p94, %p95
      %s98 = sadd.s32 %s97, 1
      %p101 = scmp.eq.s32.totalorder %s21, 1
      %p102 = scmp.ne.s32.totalorder %s97, %s99
      %p103 = scmp.eq.s32.totalorder %s21, 0
      %p104 = por %p102, %p103
      %p105 = scmp.ne.s32.totalorder %s97, %s99
      %p106 = scmp.eq.s32.totalorder %s26, 1
      %p107 = por %p105, %p106
      %p108 = scmp.ne.s32.totalorder %s99, %s100
      %p109 = scmp.eq.s32.totalorder %s26, 0
      %p110 = por %p108, %p109
      %p111 = scmp.ne.s32.totalorder %s99, %s100
      %p112 = scmp.eq.s32.totalorder %s27, 1
      %p113 = por %p111, %p112
      %p115 = scmp.ne.s32.totalorder %s100, %s114
      %p116 = scmp.eq.s32.totalorder %s27, 0
      %p117 = por %p115, %p116
      %s119 = sadd.s32 %s118, 1
      %p122 = scmp.eq.s32.totalorder %s21, 1
      %p123 = scmp.ne.s32.totalorder %s118, %s120
      %p124 = scmp.eq.s32.totalorder %s21, 0
      %p125 = por %p123, %p124
      %p126 = scmp.ne.s32.totalorder %s118, %s120
      %p127 = scmp.eq.s32.totalorder %s26, 1
      %p128 = por %p126, %p127
      %p129 = scmp.ne.s32.totalorder %s120, %s121
      %p130 = scmp.eq.s32.totalorder %s26, 0
      %p131 = por %p129, %p130
      %p132 = scmp.ne.s32.totalorder %s120, %s121
      %p133 = scmp.eq.s32.totalorder %s27, 1
      %p134 = por %p132, %p133
      %p136 = scmp.ne.s32.totalorder %s121, %s135
      %p137 = scmp.eq.s32.totalorder %s27, 0
      %p138 = por %p136, %p137
      %s140 = sadd.s32 %s139, 1
      %p143 = scmp.eq.s32.totalorder %s21, 1
      %p144 = scmp.ne.s32.totalorder %s139, %s141
      %p145 = scmp.eq.s32.totalorder %s21, 0
      %p146 = por %p144, %p145
      %p147 = scmp.ne.s32.totalorder %s139, %s141
      %p148 = scmp.eq.s32.totalorder %s26, 1
      %p149 = por %p147, %p148
      %p150 = scmp.ne.s32.totalorder %s141, %s142
      %p151 = scmp.eq.s32.totalorder %s26, 0
      %p152 = por %p150, %p151
      %p153 = scmp.ne.s32.totalorder %s141, %s142
      %p154 = scmp.eq.s32.totalorder %s27, 1
      %p155 = por %p153, %p154
      %p157 = scmp.ne.s32.totalorder %s142, %s156
      %p158 = scmp.eq.s32.totalorder %s27, 0
      %p159 = por %p157, %p158
      %s161 = sadd.s32 %s160, 1
      %p164 = scmp.eq.s32.totalorder %s21, 1
      %p165 = scmp.ne.s32.totalorder %s160, %s162
      %p166 = scmp.eq.s32.totalorder %s21, 0
      %p167 = por %p165, %p166
      %p168 = scmp.ne.s32.totalorder %s160, %s162
      %p169 = scmp.eq.s32.totalorder %s26, 1
      %p170 = por %p168, %p169
      %p171 = scmp.ne.s32.totalorder %s162, %s163
      %p172 = scmp.eq.s32.totalorder %s26, 0
      %p173 = por %p171, %p172
      %p174 = scmp.ne.s32.totalorder %s162, %s163
      %p175 = scmp.eq.s32.totalorder %s27, 1
      %p176 = por %p174, %p175
      %p178 = scmp.ne.s32.totalorder %s163, %s177
      %p179 = scmp.eq.s32.totalorder %s27, 0
      %p180 = por %p178, %p179
      %s182 = sadd.s32 %s181, 1
      %p185 = scmp.eq.s32.totalorder %s21, 1
      %p186 = scmp.ne.s32.totalorder %s181, %s183
      %p187 = scmp.eq.s32.totalorder %s21, 0
      %p188 = por %p186, %p187
      %p189 = scmp.ne.s32.totalorder %s181, %s183
      %p190 = scmp.eq.s32.totalorder %s26, 1
      %p191 = por %p189, %p190
      %p192 = scmp.ne.s32.totalorder %s183, %s184
      %p193 = scmp.eq.s32.totalorder %s26, 0
      %p194 = por %p192, %p193
      %p195 = scmp.ne.s32.totalorder %s183, %s184
      %p196 = scmp.eq.s32.totalorder %s27, 1
      %p197 = por %p195, %p196
      %p199 = scmp.ne.s32.totalorder %s184, %s198
      %p200 = scmp.eq.s32.totalorder %s27, 0
      %p201 = por %p199, %p200
      %s203 = sadd.s32 %s202, 1
      %p206 = scmp.eq.s32.totalorder %s21, 1
      %p207 = scmp.ne.s32.totalorder %s202, %s204
      %p208 = scmp.eq.s32.totalorder %s21, 0
      %p209 = por %p207, %p208
      %p210 = scmp.ne.s32.totalorder %s202, %s204
      %p211 = scmp.eq.s32.totalorder %s26, 1
      %p212 = por %p210, %p211
      %p213 = scmp.ne.s32.totalorder %s204, %s205
      %p214 = scmp.eq.s32.totalorder %s26, 0
      %p215 = por %p213, %p214
      %p216 = scmp.ne.s32.totalorder %s204, %s205
      %p217 = scmp.eq.s32.totalorder %s27, 1
      %p218 = por %p216, %p217
      %p220 = scmp.ne.s32.totalorder %s205, %s219
      %p221 = scmp.eq.s32.totalorder %s27, 0
      %p222 = por %p220, %p221
      %s224 = sadd.s32 %s223, 1
      %p227 = scmp.eq.s32.totalorder %s21, 1
      %p228 = scmp.ne.s32.totalorder %s223, %s225
      %p229 = scmp.eq.s32.totalorder %s21, 0
      %p230 = por %p228, %p229
      %p231 = scmp.ne.s32.totalorder %s223, %s225
      %p232 = scmp.eq.s32.totalorder %s26, 1
      %p233 = por %p231, %p232
      %p234 = scmp.ne.s32.totalorder %s225, %s226
      %p235 = scmp.eq.s32.totalorder %s26, 0
      %p236 = por %p234, %p235
      %p237 = scmp.ne.s32.totalorder %s225, %s226
      %p238 = scmp.eq.s32.totalorder %s27, 1
      %p239 = por %p237, %p238
      %p241 = scmp.ne.s32.totalorder %s226, %s240
      %p242 = scmp.eq.s32.totalorder %s27, 0
      %p243 = por %p241, %p242
      %s245 = sadd.s32 %s244, 1
      %p248 = scmp.eq.s32.totalorder %s21, 1
      %p249 = scmp.ne.s32.totalorder %s244, %s246
      %p250 = scmp.eq.s32.totalorder %s21, 0
      %p251 = por %p249, %p250
      %p252 = scmp.ne.s32.totalorder %s244, %s246
      %p253 = scmp.eq.s32.totalorder %s26, 1
      %p254 = por %p252, %p253
      %p255 = scmp.ne.s32.totalorder %s246, %s247
      %p256 = scmp.eq.s32.totalorder %s26, 0
      %p257 = por %p255, %p256
      %p258 = scmp.ne.s32.totalorder %s246, %s247
      %p259 = scmp.eq.s32.totalorder %s27, 1
      %p260 = por %p258, %p259
      %p262 = scmp.ne.s32.totalorder %s247, %s261
      %p263 = scmp.eq.s32.totalorder %s27, 0
      %p264 = por %p262, %p263
      %s266 = sadd.s32 %s265, 1
      %p269 = scmp.eq.s32.totalorder %s21, 1
      %p270 = scmp.ne.s32.totalorder %s265, %s267
      %p271 = scmp.eq.s32.totalorder %s21, 0
      %p272 = por %p270, %p271
      %p273 = scmp.ne.s32.totalorder %s265, %s267
      %p274 = scmp.eq.s32.totalorder %s26, 1
      %p275 = por %p273, %p274
      %p276 = scmp.ne.s32.totalorder %s267, %s268
      %p277 = scmp.eq.s32.totalorder %s26, 0
      %p278 = por %p276, %p277
      %p279 = scmp.ne.s32.totalorder %s267, %s268
      %p280 = scmp.eq.s32.totalorder %s27, 1
      %p281 = por %p279, %p280
      %p283 = scmp.ne.s32.totalorder %s268, %s282
      %p284 = scmp.eq.s32.totalorder %s27, 0
      %p285 = por %p283, %p284
      %s287 = sadd.s32 %s286, 1
      %p290 = scmp.eq.s32.totalorder %s21, 1
      %p291 = scmp.ne.s32.totalorder %s286, %s288
      %p292 = scmp.eq.s32.totalorder %s21, 0
      %p293 = por %p291, %p292
      %p294 = scmp.ne.s32.totalorder %s286, %s288
      %p295 = scmp.eq.s32.totalorder %s26, 1
      %p296 = por %p294, %p295
      %p297 = scmp.ne.s32.totalorder %s288, %s289
      %p298 = scmp.eq.s32.totalorder %s26, 0
      %p299 = por %p297, %p298
      %p300 = scmp.ne.s32.totalorder %s288, %s289
      %p301 = scmp.eq.s32.totalorder %s27, 1
      %p302 = por %p300, %p301
      %p304 = scmp.ne.s32.totalorder %s289, %s303
      %p305 = scmp.eq.s32.totalorder %s27, 0
      %p306 = por %p304, %p305
      %s308 = sadd.s32 %s307, 1
      %p311 = scmp.eq.s32.totalorder %s21, 1
      %p312 = scmp.ne.s32.totalorder %s307, %s309
      %p313 = scmp.eq.s32.totalorder %s21, 0
      %p314 = por %p312, %p313
      %p315 = scmp.ne.s32.totalorder %s307, %s309
      %p316 = scmp.eq.s32.totalorder %s26, 1
      %p317 = por %p315, %p316
      %p318 = scmp.ne.s32.totalorder %s309, %s310
      %p319 = scmp.eq.s32.totalorder %s26, 0
      %p320 = por %p318, %p319
      %p321 = scmp.ne.s32.totalorder %s309, %s310
      %p322 = scmp.eq.s32.totalorder %s27, 1
      %p323 = por %p321, %p322
      %p325 = scmp.ne.s32.totalorder %s310, %s324
      %p326 = scmp.eq.s32.totalorder %s27, 0
      %p327 = por %p325, %p326
      %s328 = ssub.s32 %s21, %s28
      %p329 = scmp.eq.s32.totalorder %s328, 0
      %s331 = sadd.s32 %s330, 1
      %s332 = scalar_select %p329, %s330, %s331
      %p335 = pneg %p329
      %p336 = scmp.eq.s32.totalorder %s21, 1
      %p337 = por %p335, %p336
      %p338 = scmp.ne.s32.totalorder %s330, %s333
      %p339 = scmp.eq.s32.totalorder %s21, 0
      %p340 = por %p338, %p339
      %p341 = scmp.ne.s32.totalorder %s330, %s333
      %p342 = scmp.eq.s32.totalorder %s26, 1
      %p343 = por %p341, %p342
      %p344 = scmp.ne.s32.totalorder %s333, %s334
      %p345 = scmp.eq.s32.totalorder %s26, 0
      %p346 = por %p344, %p345
      %p347 = scmp.ne.s32.totalorder %s333, %s334
      %p348 = scmp.eq.s32.totalorder %s27, 1
      %p349 = por %p347, %p348
      %p351 = scmp.ne.s32.totalorder %s334, %s350
      %p352 = scmp.eq.s32.totalorder %s27, 0
      %p353 = por %p351, %p352
      %p354 = scmp.le.s32.totalorder 1, %s21
      %p355 = scmp.lt.s32.totalorder %s21, 3
      %p356 = pnand %p354, %p355
      %p357 = pneg %p356
      // Predicated region
      $region9: #{simplex_transformer_forward.5} parent=5 // pred_check
        _
      $region10: #{simplex_transformer_forward.5} parent=5 // pred_check_branch
        %359 = sbr.rel (%p356) target = $region12
      $region11: #{simplex_transformer_forward.5} parent=5 // pred_region
        %s360 = ssub.s32 %s21, 1
        // Predicated region
        $region13: #{simplex_transformer_forward.5} parent=11 // pred_check
          %p361 = pneg %p68
        $region14: #{simplex_transformer_forward.5} parent=11 // pred_check_branch
          %363 = sbr.rel (%p361) target = $region16
        $region15: #{simplex_transformer_forward.5} parent=11 // pred_region
          _
        $region16: #{simplex_transformer_forward.5} parent=11 // pred_fallthru
          _
        // Predicated region
        $region17: #{simplex_transformer_forward.5} parent=11 // pred_check
          %p364 = pneg %p89
        $region18: #{simplex_transformer_forward.5} parent=11 // pred_check_branch
          %366 = sbr.rel (%p364) target = $region20
        $region19: #{simplex_transformer_forward.5} parent=11 // pred_region
          _
        $region20: #{simplex_transformer_forward.5} parent=11 // pred_fallthru
          _
        // Predicated region
        $region21: #{simplex_transformer_forward.5} parent=11 // pred_check
          %p367 = pneg %p110
        $region22: #{simplex_transformer_forward.5} parent=11 // pred_check_branch
          %369 = sbr.rel (%p367) target = $region24
        $region23: #{simplex_transformer_forward.5} parent=11 // pred_region
          _
        $region24: #{simplex_transformer_forward.5} parent=11 // pred_fallthru
          _
        // Predicated region
        $region25: #{simplex_transformer_forward.5} parent=11 // pred_check
          %p370 = pneg %p131
        $region26: #{simplex_transformer_forward.5} parent=11 // pred_check_branch
          %372 = sbr.rel (%p370) target = $region28
        $region27: #{simplex_transformer_forward.5} parent=11 // pred_region
          _
        $region28: #{simplex_transformer_forward.5} parent=11 // pred_fallthru
          _
        // Predicated region
        $region29: #{simplex_transformer_forward.5} parent=11 // pred_check
          %p373 = pneg %p152
        $region30: #{simplex_transformer_forward.5} parent=11 // pred_check_branch
          %375 = sbr.rel (%p373) target = $region32
        $region31: #{simplex_transformer_forward.5} parent=11 // pred_region
          _
        $region32: #{simplex_transformer_forward.5} parent=11 // pred_fallthru
          _
        // Predicated region
        $region33: #{simplex_transformer_forward.5} parent=11 // pred_check
          %p376 = pneg %p173
        $region34: #{simplex_transformer_forward.5} parent=11 // pred_check_branch
          %378 = sbr.rel (%p376) target = $region36
        $region35: #{simplex_transformer_forward.5} parent=11 // pred_region
          _
        $region36: #{simplex_transformer_forward.5} parent=11 // pred_fallthru
          _
        // Predicated region
        $region37: #{simplex_transformer_forward.5} parent=11 // pred_check
          %p379 = pneg %p194
        $region38: #{simplex_transformer_forward.5} parent=11 // pred_check_branch
          %381 = sbr.rel (%p379) target = $region40
        $region39: #{simplex_transformer_forward.5} parent=11 // pred_region
          _
        $region40: #{simplex_transformer_forward.5} parent=11 // pred_fallthru
          _
        // Predicated region
        $region41: #{simplex_transformer_forward.5} parent=11 // pred_check
          %p382 = pneg %p215
        $region42: #{simplex_transformer_forward.5} parent=11 // pred_check_branch
          %384 = sbr.rel (%p382) target = $region44
        $region43: #{simplex_transformer_forward.5} parent=11 // pred_region
          _
        $region44: #{simplex_transformer_forward.5} parent=11 // pred_fallthru
          _
        // Predicated region
        $region45: #{simplex_transformer_forward.5} parent=11 // pred_check
          %p385 = pneg %p236
        $region46: #{simplex_transformer_forward.5} parent=11 // pred_check_branch
          %387 = sbr.rel (%p385) target = $region48
        $region47: #{simplex_transformer_forward.5} parent=11 // pred_region
          _
        $region48: #{simplex_transformer_forward.5} parent=11 // pred_fallthru
          _
        // Predicated region
        $region49: #{simplex_transformer_forward.5} parent=11 // pred_check
          %p388 = pneg %p257
        $region50: #{simplex_transformer_forward.5} parent=11 // pred_check_branch
          %390 = sbr.rel (%p388) target = $region52
        $region51: #{simplex_transformer_forward.5} parent=11 // pred_region
          _
        $region52: #{simplex_transformer_forward.5} parent=11 // pred_fallthru
          _
        // Predicated region
        $region53: #{simplex_transformer_forward.5} parent=11 // pred_check
          %p391 = pneg %p278
        $region54: #{simplex_transformer_forward.5} parent=11 // pred_check_branch
          %393 = sbr.rel (%p391) target = $region56
        $region55: #{simplex_transformer_forward.5} parent=11 // pred_region
          _
        $region56: #{simplex_transformer_forward.5} parent=11 // pred_fallthru
          _
        // Predicated region
        $region57: #{simplex_transformer_forward.5} parent=11 // pred_check
          %p394 = pneg %p299
        $region58: #{simplex_transformer_forward.5} parent=11 // pred_check_branch
          %396 = sbr.rel (%p394) target = $region60
        $region59: #{simplex_transformer_forward.5} parent=11 // pred_region
          _
        $region60: #{simplex_transformer_forward.5} parent=11 // pred_fallthru
          _
        // Predicated region
        $region61: #{simplex_transformer_forward.5} parent=11 // pred_check
          %p397 = pneg %p320
        $region62: #{simplex_transformer_forward.5} parent=11 // pred_check_branch
          %399 = sbr.rel (%p397) target = $region64
        $region63: #{simplex_transformer_forward.5} parent=11 // pred_region
          %s401 = ssub.s32 16, 16
          %402 = vsyncadd [#allocation3], %s401
          %s404 = sshll.u32 %s13, 4
          %s405 = int_to_ptr.vmem [resolvable:$true] %s404
          %407 = dma.vmem_to_smem %s405, 16, [#allocation2], [#allocation3]
        $region64: #{simplex_transformer_forward.5} parent=11 // pred_fallthru
          _
      $region12: #{simplex_transformer_forward.5} parent=5 // pred_fallthru
        _
      %p408 = scmp.lt.s32.totalorder %s21, 2
      // Predicated region
      $region65: #{simplex_transformer_forward.5} parent=5 // pred_check
        %p409 = pneg %p408
      $region66: #{simplex_transformer_forward.5} parent=5 // pred_check_branch
        %411 = sbr.rel (%p409) target = $region68
      $region67: #{simplex_transformer_forward.5} parent=5 // pred_region
        // Predicated region
        $region69: #{simplex_transformer_forward.5} parent=67 // pred_check
          %p412 = pneg %p41
        $region70: #{simplex_transformer_forward.5} parent=67 // pred_check_branch
          %414 = sbr.rel (%p412) target = $region72
        $region71: #{simplex_transformer_forward.5} parent=67 // pred_region
          %p415 = scmp.lt.s32.totalorder %s21, 1
          %s416 = scalar_select %p415, %s21, 1
          %s417 = smul.addr %s416, 8
          %s418 = scalar_lea.vmem %s0, %s417
        $region72: #{simplex_transformer_forward.5} parent=67 // pred_fallthru
          _
      $region68: #{simplex_transformer_forward.5} parent=5 // pred_fallthru
        _
      %p419 = scmp.le.s32.totalorder 1, %s21
      %p420 = scmp.lt.s32.totalorder %s21, 3
      %p421 = pnand %p419, %p420
      %p422 = pneg %p421
      // Predicated region
      $region73: #{simplex_transformer_forward.5} parent=5 // pred_check
        _
      $region74: #{simplex_transformer_forward.5} parent=5 // pred_check_branch
        %424 = sbr.rel (%p421) target = $region76
      $region75: #{simplex_transformer_forward.5} parent=5 // pred_region
        %s425 = ssub.s32 %s21, 1
        // Predicated region
        $region77: #{simplex_transformer_forward.5} parent=75 // pred_check
          %p426 = pneg %p320
        $region78: #{simplex_transformer_forward.5} parent=75 // pred_check_branch
          %428 = sbr.rel (%p426) target = $region80
        $region79: #{simplex_transformer_forward.5} parent=75 // pred_region
          %429 = dma.done [#allocation3], 16
        $region80: #{simplex_transformer_forward.5} parent=75 // pred_fallthru
          _
        %430 = sfence
        %p431 = scmp.lt.s32.totalorder %s26, 1
        %s432 = scalar_select %p431, %s26, 1
        %s433 = smul.addr %s432, 8
        %s434 = scalar_lea.vmem %s0, %s433
        %p435 = pneg %p47
        %p436 = pneg %p44
        %p437 = pneg %p68
        %p438 = pneg %p65
        %p439 = pneg %p89
        %p440 = pneg %p86
        %p441 = pneg %p110
        %p442 = pneg %p107
        %p443 = pneg %p131
        %p444 = pneg %p128
        %p445 = pneg %p152
        %p446 = pneg %p149
        %p447 = pneg %p173
        %p448 = pneg %p170
        %p449 = pneg %p194
        %p450 = pneg %p191
        %p451 = pneg %p215
        %p452 = pneg %p212
        %p453 = pneg %p236
        %p454 = pneg %p233
        %p455 = pneg %p257
        %p456 = pneg %p254
        %p457 = pneg %p278
        %p458 = pneg %p275
        %p459 = pneg %p299
        %p460 = pneg %p296
        %p461 = pneg %p320
        %p462 = pneg %p317
        %p463 = pneg %p346
        %p464 = pneg %p343
        %p465 = scmp.lt.s32.totalorder %s26, 1
        %s466 = scalar_select %p465, %s26, 1
        %s467 = smul.addr %s466, 8
        %s468 = scalar_lea.vmem %s14, %s467
        %p469 = scmp.lt.s32.totalorder %s26, 1
        %s470 = scalar_select %p469, %s26, 1
        %s471 = smul.addr %s470, 8
        %s472 = scalar_lea.vmem %s0, %s471
        %p473 = scmp.lt.s32.totalorder %s26, 1
        %s474 = scalar_select %p473, %s26, 1
        %s475 = smul.addr %s474, 8
        %s476 = scalar_lea.vmem %s14, %s475
        %v478 = vld [vmem:[%s472] sm:$0xff]
        %v479 = vld [vmem:[%s1] sm:$0x1]
        %v480 = vld [vmem:[%s2] sm:$0x1]
        %vm481 = vcmask 261120
        %v482 = vsel %vm481, %v478, 0.0
        %483 = vadd.xlane.f32.xlu0 %v482
        %v484 = vpop.xlane.xlu0 %483
        %v485 = vrcp.pop 32.0
        %v486 = vmul.f32 %v484, %v485
        %v487 = vsub.f32 %v478, %v486
        %v488 = vmul.f32 %v487, %v487
        %v489 = vsel %vm481, %v488, 0.0
        %490 = vadd.xlane.f32.xlu0 %v489
        %v491 = vpop.xlane.xlu0 %490
        %v492 = vmul.f32 %v491, %v485
        %v493 = vadd.f32 %v492, 1e-05
        %v494 = vrsqrt.pop %v493
        %v495 = vmul.f32 %v487, %v494
        %v497 = vlaneseq
        %v498 = vshrl.u32 %v497, 7
        %v499 = vsub.s32 0, %v498
        %v500 = vrot.slane %v479, %v499
        %v502 = vmul.f32 %v495, %v500
        %v504 = vlaneseq
        %v505 = vshrl.u32 %v504, 7
        %v506 = vsub.s32 0, %v505
        %v507 = vrot.slane %v480, %v506
        %v509 = vadd.f32 %v502, %v507
        %v510 = vpack.c.bf16 %v509, %v509
        %v511 = vld [vmem:[%s3] sm:$0xf]
        %v512 = vld [vmem:[%s3 + $0x4] sm:$0xf]
        %v513 = vld [vmem:[%s3 + $0x8] sm:$0xf]
        %v514 = vld [vmem:[%s3 + $0xc] sm:$0xf]
        %v515 = vld [vmem:[%s4] sm:$0x1]
        %v517 = vlaneseq
        %v518 = vshrl.u32 %v517, 7
        %v519 = vsub.s32 0, %v518
        %v520 = vrot.slane %v515, %v519
        %v526 = vunpack.c.l.b16 %v511
        %v527 = vunpack.c.l.b16 %v512
        %v528 = vunpack.c.l.b16 %v513
        %v529 = vunpack.c.l.b16 %v514
        %v530 = vpack.c.b16 %v527, %v526
        %v531 = vpack.c.b16 %v529, %v528
        %v535 = vsel %vm481, %v510, 0
        %537 = vmatprep.subr.bf16.mxu0 0
        %538 = vmatpush1.bf16.msra.mxu0 %v530
        %539 = vmatprep.subr.bf16.mxu0 0
        %540 = vmatpush1.bf16.msra.mxu0 %v531
        %541 = vmatprep.subr.bf16.mxu0 0
        %542 = vmatpush1.bf16.msra.mxu0 0
        %543 = vmatprep.subr.bf16.mxu0 0
        %544 = vmatpush1.bf16.msra.mxu0 0
        %545 = vmatprep.subr.bf16.mxu0 0
        %546 = vmatpush1.bf16.msra.mxu0 0
        %547 = vmatprep.subr.bf16.mxu0 0
        %548 = vmatpush1.bf16.msra.mxu0 0
        %549 = vmatprep.subr.bf16.mxu0 0
        %550 = vmatpush1.bf16.msra.mxu0 0
        %551 = vmatprep.subr.bf16.mxu0 0
        %552 = vmatpush1.bf16.msra.mxu0 0
        %553 = vmatprep.subr.bf16.mxu0 0
        %554 = vmatpush1.bf16.msra.mxu0 0
        %555 = vmatprep.subr.bf16.mxu0 0
        %556 = vmatpush1.bf16.msra.mxu0 0
        %557 = vmatprep.subr.bf16.mxu0 0
        %558 = vmatpush1.bf16.msra.mxu0 0
        %559 = vmatprep.subr.bf16.mxu0 0
        %560 = vmatpush1.bf16.msra.mxu0 0
        %561 = vmatprep.subr.bf16.mxu0 0
        %562 = vmatpush1.bf16.msra.mxu0 0
        %563 = vmatprep.subr.bf16.mxu0 0
        %564 = vmatpush1.bf16.msra.mxu0 0
        %565 = vmatprep.subr.bf16.mxu0 0
        %566 = vmatpush1.bf16.msra.mxu0 0
        %567 = vmatprep.subr.bf16.mxu0 0
        %568 = vmatpush1.bf16.msra.mxu0 0
        %569 = vmatprep.mubr.bf16.mxu0 0
        %570 = vmatmul.mubr.bf16.gmra.mrb[0].mxu0 %v535
        %v571 = vpop.f32.mrb[0].mxu0
        %v572 = vadd.f32 %v520, %v571
        %v573 = vpop.f32.mrb[0].mxu0
        %v574 = vpop.f32.mrb[0].mxu0
        %v575 = vpop.f32.mrb[0].mxu0
        %576 = vdwg.mxu0
        %v577 = vpack.c.bf16 %v572, %v572
        %579 = vrot.lane.b32.xlu0 %v577, 96
        %v580 = vpop.permute.xlu0 %579
        %vm581 = vcmask 64512
        %v583 = vsel %vm581, %v577, 0
        %v586 = vsel %vm581, %v580, 0
        %588 = vmatprep.subr.bf16.mxu0 0
        %589 = vmatpush1.bf16.xpose.msra.mxu0 %v586
        %590 = vmatprep.subr.bf16.mxu0 0
        %591 = vmatpush1.bf16.xpose.msra.mxu0 0
        %592 = vmatprep.subr.bf16.mxu0 0
        %593 = vmatpush1.bf16.xpose.msra.mxu0 0
        %594 = vmatprep.subr.bf16.mxu0 0
        %595 = vmatpush1.bf16.xpose.msra.mxu0 0
        %596 = vmatprep.subr.bf16.mxu0 0
        %597 = vmatpush1.bf16.xpose.msra.mxu0 0
        %598 = vmatprep.subr.bf16.mxu0 0
        %599 = vmatpush1.bf16.xpose.msra.mxu0 0
        %600 = vmatprep.subr.bf16.mxu0 0
        %601 = vmatpush1.bf16.xpose.msra.mxu0 0
        %602 = vmatprep.subr.bf16.mxu0 0
        %603 = vmatpush1.bf16.xpose.msra.mxu0 0
        %604 = vmatprep.subr.bf16.mxu0 0
        %605 = vmatpush1.bf16.xpose.msra.mxu0 0
        %606 = vmatprep.subr.bf16.mxu0 0
        %607 = vmatpush1.bf16.xpose.msra.mxu0 0
        %608 = vmatprep.subr.bf16.mxu0 0
        %609 = vmatpush1.bf16.xpose.msra.mxu0 0
        %610 = vmatprep.subr.bf16.mxu0 0
        %611 = vmatpush1.bf16.xpose.msra.mxu0 0
        %612 = vmatprep.subr.bf16.mxu0 0
        %613 = vmatpush1.bf16.xpose.msra.mxu0 0
        %614 = vmatprep.subr.bf16.mxu0 0
        %615 = vmatpush1.bf16.xpose.msra.mxu0 0
        %616 = vmatprep.subr.bf16.mxu0 0
        %617 = vmatpush1.bf16.xpose.msra.mxu0 0
        %618 = vmatprep.subr.bf16.mxu0 0
        %619 = vmatpush1.bf16.xpose.msra.mxu0 0
        %620 = vmatprep.mubr.bf16.mxu0 0
        %621 = vmatmul.mubr.bf16.gmra.mrb[0].mxu0 %v583
        %v622 = vpop.f32.mrb[0].mxu0
        %v623 = vadd.f32 0.0, %v622
        %v624 = vpop.f32.mrb[0].mxu0
        %v625 = vpop.f32.mrb[0].mxu0
        %v626 = vpop.f32.mrb[0].mxu0
        %627 = vdwg.mxu0
        %v628 = vmul.f32 %v623, 0.35355338
        %v629 = vsel %vm581, %v628, -inf
        %630 = vmax.xlane.f32.xlu0 %v629
        %v631 = vpop.xlane.xlu0 %630
        %v632 = vsub.f32 %v628, %v631
        %v633 = vmul.f32 %v632, 1.442695
        %v634 = vpow.pop %v633
        %v635 = vsel %vm581, %v634, 0.0
        %636 = vadd.xlane.f32.xlu0 %v635
        %v637 = vpop.xlane.xlu0 %636
        %v638 = vrcp.pop %v637
        %v639 = vmul.f32 %v634, %v638
        %v640 = vpack.c.bf16 %v639, %v639
        %641 = vrot.lane.b32.xlu0 %v577, 64
        %v642 = vpop.permute.xlu0 %641
        %v644 = vsel %vm581, %v640, 0
        %vm646 = vcmask 1043456
        %v648 = vsel %vm646, %v642, 0
        %650 = vmatprep.subr.bf16.mxu0 0
        %651 = vmatpush1.bf16.msra.mxu0 %v648
        %652 = vmatprep.subr.bf16.mxu0 0
        %653 = vmatpush1.bf16.msra.mxu0 0
        %654 = vmatprep.subr.bf16.mxu0 0
        %655 = vmatpush1.bf16.msra.mxu0 0
        %656 = vmatprep.subr.bf16.mxu0 0
        %657 = vmatpush1.bf16.msra.mxu0 0
        %658 = vmatprep.subr.bf16.mxu0 0
        %659 = vmatpush1.bf16.msra.mxu0 0
        %660 = vmatprep.subr.bf16.mxu0 0
        %661 = vmatpush1.bf16.msra.mxu0 0
        %662 = vmatprep.subr.bf16.mxu0 0
        %663 = vmatpush1.bf16.msra.mxu0 0
        %664 = vmatprep.subr.bf16.mxu0 0
        %665 = vmatpush1.bf16.msra.mxu0 0
        %666 = vmatprep.subr.bf16.mxu0 0
        %667 = vmatpush1.bf16.msra.mxu0 0
        %668 = vmatprep.subr.bf16.mxu0 0
        %669 = vmatpush1.bf16.msra.mxu0 0
        %670 = vmatprep.subr.bf16.mxu0 0
        %671 = vmatpush1.bf16.msra.mxu0 0
        %672 = vmatprep.subr.bf16.mxu0 0
        %673 = vmatpush1.bf16.msra.mxu0 0
        %674 = vmatprep.subr.bf16.mxu0 0
        %675 = vmatpush1.bf16.msra.mxu0 0
        %676 = vmatprep.subr.bf16.mxu0 0
        %677 = vmatpush1.bf16.msra.mxu0 0
        %678 = vmatprep.subr.bf16.mxu0 0
        %679 = vmatpush1.bf16.msra.mxu0 0
        %680 = vmatprep.subr.bf16.mxu0 0
        %681 = vmatpush1.bf16.msra.mxu0 0
        %682 = vmatprep.mubr.bf16.mxu0 0
        %683 = vmatmul.mubr.bf16.gmra.mrb[0].mxu0 %v644
        %v684 = vpop.f32.mrb[0].mxu0
        %v685 = vadd.f32 0.0, %v684
        %v686 = vpop.f32.mrb[0].mxu0
        %v687 = vpop.f32.mrb[0].mxu0
        %v688 = vpop.f32.mrb[0].mxu0
        %689 = vdwg.mxu0
        %690 = vrot.lane.b32.xlu0 %v577, 120
        %v691 = vpop.permute.xlu0 %690
        %692 = vrot.lane.b32.xlu0 %v577, 88
        %v693 = vpop.permute.xlu0 %692
        %v695 = vsel %vm581, %v691, 0
        %v698 = vsel %vm581, %v693, 0
        %700 = vmatprep.subr.bf16.mxu0 0
        %701 = vmatpush1.bf16.xpose.msra.mxu0 %v698
        %702 = vmatprep.subr.bf16.mxu0 0
        %703 = vmatpush1.bf16.xpose.msra.mxu0 0
        %704 = vmatprep.subr.bf16.mxu0 0
        %705 = vmatpush1.bf16.xpose.msra.mxu0 0
        %706 = vmatprep.subr.bf16.mxu0 0
        %707 = vmatpush1.bf16.xpose.msra.mxu0 0
        %708 = vmatprep.subr.bf16.mxu0 0
        %709 = vmatpush1.bf16.xpose.msra.mxu0 0
        %710 = vmatprep.subr.bf16.mxu0 0
        %711 = vmatpush1.bf16.xpose.msra.mxu0 0
        %712 = vmatprep.subr.bf16.mxu0 0
        %713 = vmatpush1.bf16.xpose.msra.mxu0 0
        %714 = vmatprep.subr.bf16.mxu0 0
        %715 = vmatpush1.bf16.xpose.msra.mxu0 0
        %716 = vmatprep.subr.bf16.mxu0 0
        %717 = vmatpush1.bf16.xpose.msra.mxu0 0
        %718 = vmatprep.subr.bf16.mxu0 0
        %719 = vmatpush1.bf16.xpose.msra.mxu0 0
        %720 = vmatprep.subr.bf16.mxu0 0
        %721 = vmatpush1.bf16.xpose.msra.mxu0 0
        %722 = vmatprep.subr.bf16.mxu0 0
        %723 = vmatpush1.bf16.xpose.msra.mxu0 0
        %724 = vmatprep.subr.bf16.mxu0 0
        %725 = vmatpush1.bf16.xpose.msra.mxu0 0
        %726 = vmatprep.subr.bf16.mxu0 0
        %727 = vmatpush1.bf16.xpose.msra.mxu0 0
        %728 = vmatprep.subr.bf16.mxu0 0
        %729 = vmatpush1.bf16.xpose.msra.mxu0 0
        %730 = vmatprep.subr.bf16.mxu0 0
        %731 = vmatpush1.bf16.xpose.msra.mxu0 0
        %732 = vmatprep.mubr.bf16.mxu0 0
        %733 = vmatmul.mubr.bf16.gmra.mrb[0].mxu0 %v695
        %v734 = vpop.f32.mrb[0].mxu0
        %v735 = vadd.f32 0.0, %v734
        %v736 = vpop.f32.mrb[0].mxu0
        %v737 = vpop.f32.mrb[0].mxu0
        %v738 = vpop.f32.mrb[0].mxu0
        %739 = vdwg.mxu0
        %v740 = vmul.f32 %v735, 0.35355338
        %v741 = vsel %vm581, %v740, -inf
        %742 = vmax.xlane.f32.xlu0 %v741
        %v743 = vpop.xlane.xlu0 %742
        %v744 = vsub.f32 %v740, %v743
        %v745 = vmul.f32 %v744, 1.442695
        %v746 = vpow.pop %v745
        %v747 = vsel %vm581, %v746, 0.0
        %748 = vadd.xlane.f32.xlu0 %v747
        %v749 = vpop.xlane.xlu0 %748
        %v750 = vrcp.pop %v749
        %v751 = vmul.f32 %v746, %v750
        %v752 = vpack.c.bf16 %v751, %v751
        %753 = vrot.lane.b32.xlu0 %v577, 56
        %v754 = vpop.permute.xlu0 %753
        %v756 = vsel %vm581, %v752, 0
        %v759 = vsel %vm646, %v754, 0
        %761 = vmatprep.subr.bf16.mxu0 0
        %762 = vmatpush1.bf16.msra.mxu0 %v759
        %763 = vmatprep.subr.bf16.mxu0 0
        %764 = vmatpush1.bf16.msra.mxu0 0
        %765 = vmatprep.subr.bf16.mxu0 0
        %766 = vmatpush1.bf16.msra.mxu0 0
        %767 = vmatprep.subr.bf16.mxu0 0
        %768 = vmatpush1.bf16.msra.mxu0 0
        %769 = vmatprep.subr.bf16.mxu0 0
        %770 = vmatpush1.bf16.msra.mxu0 0
        %771 = vmatprep.subr.bf16.mxu0 0
        %772 = vmatpush1.bf16.msra.mxu0 0
        %773 = vmatprep.subr.bf16.mxu0 0
        %774 = vmatpush1.bf16.msra.mxu0 0
        %775 = vmatprep.subr.bf16.mxu0 0
        %776 = vmatpush1.bf16.msra.mxu0 0
        %777 = vmatprep.subr.bf16.mxu0 0
        %778 = vmatpush1.bf16.msra.mxu0 0
        %779 = vmatprep.subr.bf16.mxu0 0
        %780 = vmatpush1.bf16.msra.mxu0 0
        %781 = vmatprep.subr.bf16.mxu0 0
        %782 = vmatpush1.bf16.msra.mxu0 0
        %783 = vmatprep.subr.bf16.mxu0 0
        %784 = vmatpush1.bf16.msra.mxu0 0
        %785 = vmatprep.subr.bf16.mxu0 0
        %786 = vmatpush1.bf16.msra.mxu0 0
        %787 = vmatprep.subr.bf16.mxu0 0
        %788 = vmatpush1.bf16.msra.mxu0 0
        %789 = vmatprep.subr.bf16.mxu0 0
        %790 = vmatpush1.bf16.msra.mxu0 0
        %791 = vmatprep.subr.bf16.mxu0 0
        %792 = vmatpush1.bf16.msra.mxu0 0
        %793 = vmatprep.mubr.bf16.mxu0 0
        %794 = vmatmul.mubr.bf16.gmra.mrb[0].mxu0 %v756
        %v795 = vpop.f32.mrb[0].mxu0
        %v796 = vadd.f32 0.0, %v795
        %v797 = vpop.f32.mrb[0].mxu0
        %v798 = vpop.f32.mrb[0].mxu0
        %v799 = vpop.f32.mrb[0].mxu0
        %800 = vdwg.mxu0
        %801 = vrot.lane.b32.xlu0 %v577, 112
        %v802 = vpop.permute.xlu0 %801
        %803 = vrot.lane.b32.xlu0 %v577, 80
        %v804 = vpop.permute.xlu0 %803
        %v806 = vsel %vm581, %v802, 0
        %v809 = vsel %vm581, %v804, 0
        %811 = vmatprep.subr.bf16.mxu0 0
        %812 = vmatpush1.bf16.xpose.msra.mxu0 %v809
        %813 = vmatprep.subr.bf16.mxu0 0
        %814 = vmatpush1.bf16.xpose.msra.mxu0 0
        %815 = vmatprep.subr.bf16.mxu0 0
        %816 = vmatpush1.bf16.xpose.msra.mxu0 0
        %817 = vmatprep.subr.bf16.mxu0 0
        %818 = vmatpush1.bf16.xpose.msra.mxu0 0
        %819 = vmatprep.subr.bf16.mxu0 0
        %820 = vmatpush1.bf16.xpose.msra.mxu0 0
        %821 = vmatprep.subr.bf16.mxu0 0
        %822 = vmatpush1.bf16.xpose.msra.mxu0 0
        %823 = vmatprep.subr.bf16.mxu0 0
        %824 = vmatpush1.bf16.xpose.msra.mxu0 0
        %825 = vmatprep.subr.bf16.mxu0 0
        %826 = vmatpush1.bf16.xpose.msra.mxu0 0
        %827 = vmatprep.subr.bf16.mxu0 0
        %828 = vmatpush1.bf16.xpose.msra.mxu0 0
        %829 = vmatprep.subr.bf16.mxu0 0
        %830 = vmatpush1.bf16.xpose.msra.mxu0 0
        %831 = vmatprep.subr.bf16.mxu0 0
        %832 = vmatpush1.bf16.xpose.msra.mxu0 0
        %833 = vmatprep.subr.bf16.mxu0 0
        %834 = vmatpush1.bf16.xpose.msra.mxu0 0
        %835 = vmatprep.subr.bf16.mxu0 0
        %836 = vmatpush1.bf16.xpose.msra.mxu0 0
        %837 = vmatprep.subr.bf16.mxu0 0
        %838 = vmatpush1.bf16.xpose.msra.mxu0 0
        %839 = vmatprep.subr.bf16.mxu0 0
        %840 = vmatpush1.bf16.xpose.msra.mxu0 0
        %841 = vmatprep.subr.bf16.mxu0 0
        %842 = vmatpush1.bf16.xpose.msra.mxu0 0
        %843 = vmatprep.mubr.bf16.mxu0 0
        %844 = vmatmul.mubr.bf16.gmra.mrb[0].mxu0 %v806
        %v845 = vpop.f32.mrb[0].mxu0
        %v846 = vadd.f32 0.0, %v845
        %v847 = vpop.f32.mrb[0].mxu0
        %v848 = vpop.f32.mrb[0].mxu0
        %v849 = vpop.f32.mrb[0].mxu0
        %850 = vdwg.mxu0
        %v851 = vmul.f32 %v846, 0.35355338
        %v852 = vsel %vm581, %v851, -inf
        %853 = vmax.xlane.f32.xlu0 %v852
        %v854 = vpop.xlane.xlu0 %853
        %v855 = vsub.f32 %v851, %v854
        %v856 = vmul.f32 %v855, 1.442695
        %v857 = vpow.pop %v856
        %v858 = vsel %vm581, %v857, 0.0
        %859 = vadd.xlane.f32.xlu0 %v858
        %v860 = vpop.xlane.xlu0 %859
        %v861 = vrcp.pop %v860
        %v862 = vmul.f32 %v857, %v861
        %v863 = vpack.c.bf16 %v862, %v862
        %864 = vrot.lane.b32.xlu0 %v577, 48
        %v865 = vpop.permute.xlu0 %864
        %v867 = vsel %vm581, %v863, 0
        %v870 = vsel %vm646, %v865, 0
        %872 = vmatprep.subr.bf16.mxu0 0
        %873 = vmatpush1.bf16.msra.mxu0 %v870
        %874 = vmatprep.subr.bf16.mxu0 0
        %875 = vmatpush1.bf16.msra.mxu0 0
        %876 = vmatprep.subr.bf16.mxu0 0
        %877 = vmatpush1.bf16.msra.mxu0 0
        %878 = vmatprep.subr.bf16.mxu0 0
        %879 = vmatpush1.bf16.msra.mxu0 0
        %880 = vmatprep.subr.bf16.mxu0 0
        %881 = vmatpush1.bf16.msra.mxu0 0
        %882 = vmatprep.subr.bf16.mxu0 0
        %883 = vmatpush1.bf16.msra.mxu0 0
        %884 = vmatprep.subr.bf16.mxu0 0
        %885 = vmatpush1.bf16.msra.mxu0 0
        %886 = vmatprep.subr.bf16.mxu0 0
        %887 = vmatpush1.bf16.msra.mxu0 0
        %888 = vmatprep.subr.bf16.mxu0 0
        %889 = vmatpush1.bf16.msra.mxu0 0
        %890 = vmatprep.subr.bf16.mxu0 0
        %891 = vmatpush1.bf16.msra.mxu0 0
        %892 = vmatprep.subr.bf16.mxu0 0
        %893 = vmatpush1.bf16.msra.mxu0 0
        %894 = vmatprep.subr.bf16.mxu0 0
        %895 = vmatpush1.bf16.msra.mxu0 0
        %896 = vmatprep.subr.bf16.mxu0 0
        %897 = vmatpush1.bf16.msra.mxu0 0
        %898 = vmatprep.subr.bf16.mxu0 0
        %899 = vmatpush1.bf16.msra.mxu0 0
        %900 = vmatprep.subr.bf16.mxu0 0
        %901 = vmatpush1.bf16.msra.mxu0 0
        %902 = vmatprep.subr.bf16.mxu0 0
        %903 = vmatpush1.bf16.msra.mxu0 0
        %904 = vmatprep.mubr.bf16.mxu0 0
        %905 = vmatmul.mubr.bf16.gmra.mrb[0].mxu0 %v867
        %v906 = vpop.f32.mrb[0].mxu0
        %v907 = vadd.f32 0.0, %v906
        %v908 = vpop.f32.mrb[0].mxu0
        %v909 = vpop.f32.mrb[0].mxu0
        %v910 = vpop.f32.mrb[0].mxu0
        %911 = vdwg.mxu0
        %912 = vrot.lane.b32.xlu0 %v577, 104
        %v913 = vpop.permute.xlu0 %912
        %914 = vrot.lane.b32.xlu0 %v577, 72
        %v915 = vpop.permute.xlu0 %914
        %v917 = vsel %vm581, %v913, 0
        %v920 = vsel %vm581, %v915, 0
        %922 = vmatprep.subr.bf16.mxu0 0
        %923 = vmatpush1.bf16.xpose.msra.mxu0 %v920
        %924 = vmatprep.subr.bf16.mxu0 0
        %925 = vmatpush1.bf16.xpose.msra.mxu0 0
        %926 = vmatprep.subr.bf16.mxu0 0
        %927 = vmatpush1.bf16.xpose.msra.mxu0 0
        %928 = vmatprep.subr.bf16.mxu0 0
        %929 = vmatpush1.bf16.xpose.msra.mxu0 0
        %930 = vmatprep.subr.bf16.mxu0 0
        %931 = vmatpush1.bf16.xpose.msra.mxu0 0
        %932 = vmatprep.subr.bf16.mxu0 0
        %933 = vmatpush1.bf16.xpose.msra.mxu0 0
        %934 = vmatprep.subr.bf16.mxu0 0
        %935 = vmatpush1.bf16.xpose.msra.mxu0 0
        %936 = vmatprep.subr.bf16.mxu0 0
        %937 = vmatpush1.bf16.xpose.msra.mxu0 0
        %938 = vmatprep.subr.bf16.mxu0 0
        %939 = vmatpush1.bf16.xpose.msra.mxu0 0
        %940 = vmatprep.subr.bf16.mxu0 0
        %941 = vmatpush1.bf16.xpose.msra.mxu0 0
        %942 = vmatprep.subr.bf16.mxu0 0
        %943 = vmatpush1.bf16.xpose.msra.mxu0 0
        %944 = vmatprep.subr.bf16.mxu0 0
        %945 = vmatpush1.bf16.xpose.msra.mxu0 0
        %946 = vmatprep.subr.bf16.mxu0 0
        %947 = vmatpush1.bf16.xpose.msra.mxu0 0
        %948 = vmatprep.subr.bf16.mxu0 0
        %949 = vmatpush1.bf16.xpose.msra.mxu0 0
        %950 = vmatprep.subr.bf16.mxu0 0
        %951 = vmatpush1.bf16.xpose.msra.mxu0 0
        %952 = vmatprep.subr.bf16.mxu0 0
        %953 = vmatpush1.bf16.xpose.msra.mxu0 0
        %954 = vmatprep.mubr.bf16.mxu0 0
        %955 = vmatmul.mubr.bf16.gmra.mrb[0].mxu0 %v917
        %v956 = vpop.f32.mrb[0].mxu0
        %v957 = vadd.f32 0.0, %v956
        %v958 = vpop.f32.mrb[0].mxu0
        %v959 = vpop.f32.mrb[0].mxu0
        %v960 = vpop.f32.mrb[0].mxu0
        %961 = vdwg.mxu0
        %v962 = vmul.f32 %v957, 0.35355338
        %v963 = vsel %vm581, %v962, -inf
        %964 = vmax.xlane.f32.xlu0 %v963
        %v965 = vpop.xlane.xlu0 %964
        %v966 = vsub.f32 %v962, %v965
        %v967 = vmul.f32 %v966, 1.442695
        %v968 = vpow.pop %v967
        %v969 = vsel %vm581, %v968, 0.0
        %970 = vadd.xlane.f32.xlu0 %v969
        %v971 = vpop.xlane.xlu0 %970
        %v972 = vrcp.pop %v971
        %v973 = vmul.f32 %v968, %v972
        %v974 = vpack.c.bf16 %v973, %v973
        %975 = vrot.lane.b32.xlu0 %v577, 40
        %v976 = vpop.permute.xlu0 %975
        %v978 = vsel %vm581, %v974, 0
        %v981 = vsel %vm646, %v976, 0
        %983 = vmatprep.subr.bf16.mxu0 0
        %984 = vmatpush1.bf16.msra.mxu0 %v981
        %985 = vmatprep.subr.bf16.mxu0 0
        %986 = vmatpush1.bf16.msra.mxu0 0
        %987 = vmatprep.subr.bf16.mxu0 0
        %988 = vmatpush1.bf16.msra.mxu0 0
        %989 = vmatprep.subr.bf16.mxu0 0
        %990 = vmatpush1.bf16.msra.mxu0 0
        %991 = vmatprep.subr.bf16.mxu0 0
        %992 = vmatpush1.bf16.msra.mxu0 0
        %993 = vmatprep.subr.bf16.mxu0 0
        %994 = vmatpush1.bf16.msra.mxu0 0
        %995 = vmatprep.subr.bf16.mxu0 0
        %996 = vmatpush1.bf16.msra.mxu0 0
        %997 = vmatprep.subr.bf16.mxu0 0
        %998 = vmatpush1.bf16.msra.mxu0 0
        %999 = vmatprep.subr.bf16.mxu0 0
        %1000 = vmatpush1.bf16.msra.mxu0 0
        %1001 = vmatprep.subr.bf16.mxu0 0
        %1002 = vmatpush1.bf16.msra.mxu0 0
        %1003 = vmatprep.subr.bf16.mxu0 0
        %1004 = vmatpush1.bf16.msra.mxu0 0
        %1005 = vmatprep.subr.bf16.mxu0 0
        %1006 = vmatpush1.bf16.msra.mxu0 0
        %1007 = vmatprep.subr.bf16.mxu0 0
        %1008 = vmatpush1.bf16.msra.mxu0 0
        %1009 = vmatprep.subr.bf16.mxu0 0
        %1010 = vmatpush1.bf16.msra.mxu0 0
        %1011 = vmatprep.subr.bf16.mxu0 0
        %1012 = vmatpush1.bf16.msra.mxu0 0
        %1013 = vmatprep.subr.bf16.mxu0 0
        %1014 = vmatpush1.bf16.msra.mxu0 0
        %1015 = vmatprep.mubr.bf16.mxu0 0
        %1016 = vmatmul.mubr.bf16.gmra.mrb[0].mxu0 %v978
        %v1017 = vpop.f32.mrb[0].mxu0
        %v1018 = vadd.f32 0.0, %v1017
        %v1019 = vpop.f32.mrb[0].mxu0
        %v1020 = vpop.f32.mrb[0].mxu0
        %v1021 = vpop.f32.mrb[0].mxu0
        %1022 = vdwg.mxu0
        %1024 = vrot.lane.b32.xlu0 %v796, 8
        %v1025 = vpop.permute.xlu0 %1024
        %1028 = vrot.lane.b32.xlu0 %v907, 16
        %v1029 = vpop.permute.xlu0 %1028
        %1032 = vrot.lane.b32.xlu0 %v1018, 24
        %v1033 = vpop.permute.xlu0 %1032
        %v1035 = vsel %vm581, %v685, %v1025
        %vm1036 = vcmask 130048
        %v1037 = vsel %vm1036, %v1035, %v1029
        %vm1038 = vcmask 195584
        %v1039 = vsel %vm1038, %v1037, %v1033
        %v1040 = vpack.c.bf16 %v1039, %v1039
        %v1041 = vld [vmem:[%s5] sm:$0xf]
        %v1042 = vld [vmem:[%s5 + $0x4] sm:$0xf]
        %v1043 = vld [vmem:[%s5 + $0x8] sm:$0xf]
        %v1044 = vld [vmem:[%s5 + $0xc] sm:$0xf]
        %v1045 = vld [vmem:[%s6] sm:$0x1]
        %v1047 = vlaneseq
        %v1048 = vshrl.u32 %v1047, 7
        %v1049 = vsub.s32 0, %v1048
        %v1050 = vrot.slane %v1045, %v1049
        %v1056 = vunpack.c.l.b16 %v1041
        %v1057 = vunpack.c.l.b16 %v1042
        %v1058 = vunpack.c.l.b16 %v1043
        %v1059 = vunpack.c.l.b16 %v1044
        %v1060 = vpack.c.b16 %v1057, %v1056
        %v1061 = vpack.c.b16 %v1059, %v1058
        %v1065 = vsel %vm481, %v1040, 0
        %1067 = vmatprep.subr.bf16.mxu0 0
        %1068 = vmatpush1.bf16.msra.mxu0 %v1060
        %1069 = vmatprep.subr.bf16.mxu0 0
        %1070 = vmatpush1.bf16.msra.mxu0 %v1061
        %1071 = vmatprep.subr.bf16.mxu0 0
        %1072 = vmatpush1.bf16.msra.mxu0 0
        %1073 = vmatprep.subr.bf16.mxu0 0
        %1074 = vmatpush1.bf16.msra.mxu0 0
        %1075 = vmatprep.subr.bf16.mxu0 0
        %1076 = vmatpush1.bf16.msra.mxu0 0
        %1077 = vmatprep.subr.bf16.mxu0 0
        %1078 = vmatpush1.bf16.msra.mxu0 0
        %1079 = vmatprep.subr.bf16.mxu0 0
        %1080 = vmatpush1.bf16.msra.mxu0 0
        %1081 = vmatprep.subr.bf16.mxu0 0
        %1082 = vmatpush1.bf16.msra.mxu0 0
        %1083 = vmatprep.subr.bf16.mxu0 0
        %1084 = vmatpush1.bf16.msra.mxu0 0
        %1085 = vmatprep.subr.bf16.mxu0 0
        %1086 = vmatpush1.bf16.msra.mxu0 0
        %1087 = vmatprep.subr.bf16.mxu0 0
        %1088 = vmatpush1.bf16.msra.mxu0 0
        %1089 = vmatprep.subr.bf16.mxu0 0
        %1090 = vmatpush1.bf16.msra.mxu0 0
        %1091 = vmatprep.subr.bf16.mxu0 0
        %1092 = vmatpush1.bf16.msra.mxu0 0
        %1093 = vmatprep.subr.bf16.mxu0 0
        %1094 = vmatpush1.bf16.msra.mxu0 0
        %1095 = vmatprep.subr.bf16.mxu0 0
        %1096 = vmatpush1.bf16.msra.mxu0 0
        %1097 = vmatprep.subr.bf16.mxu0 0
        %1098 = vmatpush1.bf16.msra.mxu0 0
        %1099 = vmatprep.mubr.bf16.mxu0 0
        %1100 = vmatmul.mubr.bf16.gmra.mrb[0].mxu0 %v1065
        %v1101 = vpop.f32.mrb[0].mxu0
        %v1102 = vadd.f32 %v1050, %v1101
        %v1103 = vpop.f32.mrb[0].mxu0
        %v1104 = vpop.f32.mrb[0].mxu0
        %v1105 = vpop.f32.mrb[0].mxu0
        %1106 = vdwg.mxu0
        %s1107 = sld [smem:[#allocation2]]
        %v1108 = vstv %s1107
        %v1109 = vmul.f32 %v1108, %v1102
        %v1110 = vadd.f32 %v478, %v1109
        %v1111 = vld [vmem:[%s7] sm:$0x1]
        %v1112 = vld [vmem:[%s8] sm:$0x1]
        %v1113 = vsel %vm481, %v1110, 0.0
        %1114 = vadd.xlane.f32.xlu0 %v1113
        %v1115 = vpop.xlane.xlu0 %1114
        %v1116 = vmul.f32 %v1115, %v485
        %v1117 = vsub.f32 %v1110, %v1116
        %v1118 = vmul.f32 %v1117, %v1117
        %v1119 = vsel %vm481, %v1118, 0.0
        %1120 = vadd.xlane.f32.xlu0 %v1119
        %v1121 = vpop.xlane.xlu0 %1120
        %v1122 = vmul.f32 %v1121, %v485
        %v1123 = vadd.f32 %v1122, 1e-05
        %v1124 = vrsqrt.pop %v1123
        %v1125 = vmul.f32 %v1117, %v1124
        %v1127 = vlaneseq
        %v1128 = vshrl.u32 %v1127, 7
        %v1129 = vsub.s32 0, %v1128
        %v1130 = vrot.slane %v1111, %v1129
        %v1132 = vmul.f32 %v1125, %v1130
        %v1134 = vlaneseq
        %v1135 = vshrl.u32 %v1134, 7
        %v1136 = vsub.s32 0, %v1135
        %v1137 = vrot.slane %v1112, %v1136
        %v1139 = vadd.f32 %v1132, %v1137
        %v1140 = vpack.c.bf16 %v1139, %v1139
        %v1141 = vld [vmem:[%s9] sm:$0xf]
        %v1142 = vld [vmem:[%s9 + $0x4] sm:$0xf]
        %v1143 = vld [vmem:[%s9 + $0x8] sm:$0xf]
        %v1144 = vld [vmem:[%s9 + $0xc] sm:$0xf]
        %v1145 = vld [vmem:[%s10] sm:$0x1]
        %v1147 = vlaneseq
        %v1148 = vshrl.u32 %v1147, 7
        %v1149 = vsub.s32 0, %v1148
        %v1150 = vrot.slane %v1145, %v1149
        %v1156 = vunpack.c.l.b16 %v1141
        %v1157 = vunpack.c.l.b16 %v1142
        %v1158 = vunpack.c.l.b16 %v1143
        %v1159 = vunpack.c.l.b16 %v1144
        %v1160 = vpack.c.b16 %v1157, %v1156
        %v1161 = vpack.c.b16 %v1159, %v1158
        %v1165 = vsel %vm481, %v1140, 0
        %1167 = vmatprep.subr.bf16.mxu0 0
        %1168 = vmatpush1.bf16.msra.mxu0 %v1160
        %1169 = vmatprep.subr.bf16.mxu0 0
        %1170 = vmatpush1.bf16.msra.mxu0 %v1161
        %1171 = vmatprep.subr.bf16.mxu0 0
        %1172 = vmatpush1.bf16.msra.mxu0 0
        %1173 = vmatprep.subr.bf16.mxu0 0
        %1174 = vmatpush1.bf16.msra.mxu0 0
        %1175 = vmatprep.subr.bf16.mxu0 0
        %1176 = vmatpush1.bf16.msra.mxu0 0
        %1177 = vmatprep.subr.bf16.mxu0 0
        %1178 = vmatpush1.bf16.msra.mxu0 0
        %1179 = vmatprep.subr.bf16.mxu0 0
        %1180 = vmatpush1.bf16.msra.mxu0 0
        %1181 = vmatprep.subr.bf16.mxu0 0
        %1182 = vmatpush1.bf16.msra.mxu0 0
        %1183 = vmatprep.subr.bf16.mxu0 0
        %1184 = vmatpush1.bf16.msra.mxu0 0
        %1185 = vmatprep.subr.bf16.mxu0 0
        %1186 = vmatpush1.bf16.msra.mxu0 0
        %1187 = vmatprep.subr.bf16.mxu0 0
        %1188 = vmatpush1.bf16.msra.mxu0 0
        %1189 = vmatprep.subr.bf16.mxu0 0
        %1190 = vmatpush1.bf16.msra.mxu0 0
        %1191 = vmatprep.subr.bf16.mxu0 0
        %1192 = vmatpush1.bf16.msra.mxu0 0
        %1193 = vmatprep.subr.bf16.mxu0 0
        %1194 = vmatpush1.bf16.msra.mxu0 0
        %1195 = vmatprep.subr.bf16.mxu0 0
        %1196 = vmatpush1.bf16.msra.mxu0 0
        %1197 = vmatprep.subr.bf16.mxu0 0
        %1198 = vmatpush1.bf16.msra.mxu0 0
        %1199 = vmatprep.mubr.bf16.mxu0 0
        %1200 = vmatmul.mubr.bf16.gmra.mrb[0].mxu0 %v1165
        %v1201 = vpop.f32.mrb[0].mxu0
        %v1202 = vadd.f32 %v1150, %v1201
        %v1203 = vpop.f32.mrb[0].mxu0
        %v1204 = vpop.f32.mrb[0].mxu0
        %v1205 = vpop.f32.mrb[0].mxu0
        %1206 = vdwg.mxu0
        %v1207 = vmul.f32 %v1202, %v1202
        %v1208 = vmul.f32 %v1202, %v1207
        %v1209 = vmul.f32 %v1208, 0.044715
        %v1210 = vadd.f32 %v1202, %v1209
        %v1211 = vmul.f32 %v1210, 0.7978846
        %v1212 = vtanh.pop %v1211
        %v1213 = vadd.f32 %v1212, 1.0
        %v1214 = vmul.f32 %v1213, 0.5
        %v1215 = vmul.f32 %v1202, %v1214
        %v1216 = vpack.c.bf16 %v1215, %v1215
        %v1217 = vld [vmem:[%s11] sm:$0xf]
        %v1218 = vld [vmem:[%s11 + $0x4] sm:$0xf]
        %v1219 = vld [vmem:[%s11 + $0x8] sm:$0xf]
        %v1220 = vld [vmem:[%s11 + $0xc] sm:$0xf]
        %v1221 = vld [vmem:[%s11 + $0x10] sm:$0xf]
        %v1222 = vld [vmem:[%s11 + $0x14] sm:$0xf]
        %v1223 = vld [vmem:[%s11 + $0x18] sm:$0xf]
        %v1224 = vld [vmem:[%s11 + $0x1c] sm:$0xf]
        %v1225 = vld [vmem:[%s11 + $0x20] sm:$0xf]
        %v1226 = vld [vmem:[%s11 + $0x24] sm:$0xf]
        %v1227 = vld [vmem:[%s11 + $0x28] sm:$0xf]
        %v1228 = vld [vmem:[%s11 + $0x2c] sm:$0xf]
        %v1229 = vld [vmem:[%s11 + $0x30] sm:$0xf]
        %v1230 = vld [vmem:[%s11 + $0x34] sm:$0xf]
        %v1231 = vld [vmem:[%s11 + $0x38] sm:$0xf]
        %v1232 = vld [vmem:[%s11 + $0x3c] sm:$0xf]
        %v1233 = vld [vmem:[%s12] sm:$0x1]
        %v1235 = vlaneseq
        %v1236 = vshrl.u32 %v1235, 7
        %v1237 = vsub.s32 0, %v1236
        %v1238 = vrot.slane %v1233, %v1237
        %v1256 = vunpack.c.l.b16 %v1217
        %v1257 = vunpack.c.l.b16 %v1218
        %v1258 = vunpack.c.l.b16 %v1219
        %v1259 = vunpack.c.l.b16 %v1220
        %v1260 = vunpack.c.l.b16 %v1221
        %v1261 = vunpack.c.l.b16 %v1222
        %v1262 = vunpack.c.l.b16 %v1223
        %v1263 = vunpack.c.l.b16 %v1224
        %v1264 = vunpack.c.l.b16 %v1225
        %v1265 = vunpack.c.l.b16 %v1226
        %v1266 = vunpack.c.l.b16 %v1227
        %v1267 = vunpack.c.l.b16 %v1228
        %v1268 = vunpack.c.l.b16 %v1229
        %v1269 = vunpack.c.l.b16 %v1230
        %v1270 = vunpack.c.l.b16 %v1231
        %v1271 = vunpack.c.l.b16 %v1232
        %v1272 = vpack.c.b16 %v1257, %v1256
        %v1273 = vpack.c.b16 %v1259, %v1258
        %v1274 = vpack.c.b16 %v1261, %v1260
        %v1275 = vpack.c.b16 %v1263, %v1262
        %v1276 = vpack.c.b16 %v1265, %v1264
        %v1277 = vpack.c.b16 %v1267, %v1266
        %v1278 = vpack.c.b16 %v1269, %v1268
        %v1279 = vpack.c.b16 %v1271, %v1270
        %1288 = vmatprep.subr.bf16.mxu0 0
        %1289 = vmatpush1.bf16.msra.mxu0 %v1272
        %1290 = vmatprep.subr.bf16.mxu0 0
        %1291 = vmatpush1.bf16.msra.mxu0 %v1273
        %1292 = vmatprep.subr.bf16.mxu0 0
        %1293 = vmatpush1.bf16.msra.mxu0 %v1274
        %1294 = vmatprep.subr.bf16.mxu0 0
        %1295 = vmatpush1.bf16.msra.mxu0 %v1275
        %1296 = vmatprep.subr.bf16.mxu0 0
        %1297 = vmatpush1.bf16.msra.mxu0 %v1276
        %1298 = vmatprep.subr.bf16.mxu0 0
        %1299 = vmatpush1.bf16.msra.mxu0 %v1277
        %1300 = vmatprep.subr.bf16.mxu0 0
        %1301 = vmatpush1.bf16.msra.mxu0 %v1278
        %1302 = vmatprep.subr.bf16.mxu0 0
        %1303 = vmatpush1.bf16.msra.mxu0 %v1279
        %1304 = vmatprep.subr.bf16.mxu0 0
        %1305 = vmatpush1.bf16.msra.mxu0 0
        %1306 = vmatprep.subr.bf16.mxu0 0
        %1307 = vmatpush1.bf16.msra.mxu0 0
        %1308 = vmatprep.subr.bf16.mxu0 0
        %1309 = vmatpush1.bf16.msra.mxu0 0
        %1310 = vmatprep.subr.bf16.mxu0 0
        %1311 = vmatpush1.bf16.msra.mxu0 0
        %1312 = vmatprep.subr.bf16.mxu0 0
        %1313 = vmatpush1.bf16.msra.mxu0 0
        %1314 = vmatprep.subr.bf16.mxu0 0
        %1315 = vmatpush1.bf16.msra.mxu0 0
        %1316 = vmatprep.subr.bf16.mxu0 0
        %1317 = vmatpush1.bf16.msra.mxu0 0
        %1318 = vmatprep.subr.bf16.mxu0 0
        %1319 = vmatpush1.bf16.msra.mxu0 0
        %1320 = vmatprep.mubr.bf16.mxu0 0
        %1321 = vmatmul.mubr.bf16.gmra.mrb[0].mxu0 %v1216
        %v1322 = vpop.f32.mrb[0].mxu0
        %v1323 = vadd.f32 %v1238, %v1322
        %v1324 = vpop.f32.mrb[0].mxu0
        %v1325 = vpop.f32.mrb[0].mxu0
        %v1326 = vpop.f32.mrb[0].mxu0
        %1327 = vdwg.mxu0
        %s1328 = sld [smem:[#allocation2 + $0x1]]
        %v1329 = vstv %s1328
        %v1330 = vmul.f32 %v1329, %v1323
        %v1331 = vadd.f32 %v1110, %v1330
        %1332 = vst.msk [vmem:[%s476] sm:$0xff] %vm481, %v1331
        %p1333 = scmp.lt.s32.totalorder %s26, 1
        %s1334 = scalar_select %p1333, %s26, 1
        %s1335 = smul.addr %s1334, 8
        %s1336 = scalar_lea.vmem %s14, %s1335
        // Predicated region
        $region81: #{simplex_transformer_forward.5} parent=75 // pred_check
          %p1337 = pneg %p343
        $region82: #{simplex_transformer_forward.5} parent=75 // pred_check_branch
          %1339 = sbr.rel (%p1337) target = $region84
        $region83: #{simplex_transformer_forward.5} parent=75 // pred_region
          _
        $region84: #{simplex_transformer_forward.5} parent=75 // pred_fallthru
          _
      $region76: #{simplex_transformer_forward.5} parent=5 // pred_fallthru
        _
      %p1340 = scmp.le.s32.totalorder 2, %s21
      // Predicated region
      $region85: #{simplex_transformer_forward.5} parent=5 // pred_check
        %p1341 = pneg %p1340
      $region86: #{simplex_transformer_forward.5} parent=5 // pred_check_branch
        %1343 = sbr.rel (%p1341) target = $region88
      $region87: #{simplex_transformer_forward.5} parent=5 // pred_region
        %s1344 = ssub.s32 %s21, 2
        // Predicated region
        $region89: #{simplex_transformer_forward.5} parent=87 // pred_check
          %p1345 = pneg %p349
        $region90: #{simplex_transformer_forward.5} parent=87 // pred_check_branch
          %1347 = sbr.rel (%p1345) target = $region92
        $region91: #{simplex_transformer_forward.5} parent=87 // pred_region
          %p1348 = scmp.lt.s32.totalorder %s27, 1
          %s1349 = scalar_select %p1348, %s27, 1
          %s1350 = smul.addr %s1349, 8
          %s1351 = scalar_lea.vmem %s14, %s1350
        $region92: #{simplex_transformer_forward.5} parent=87 // pred_fallthru
          _
      $region88: #{simplex_transformer_forward.5} parent=5 // pred_fallthru
        _
    $region6: #{simplex_transformer_forward.5} parent=1 // loop_footer
      %s25 = sadd.s32 1, %s21
    $region7: #{simplex_transformer_forward.5} parent=1 // loop_footer_branch
      %20 = sbr.rel target = $region3
    $region8: #{simplex_transformer_forward.5} parent=1 // loop_exit
      _
    %1352 = vsyncpa [#allocation3], 1
    %s1353 = scalar_lea.sflag [#allocation3], 1
    %1354 = vsyncpa %s1353, 1

</llo_original>
